<compile_context>
chip_gen: v7x
topology: tpu7x:2x2x1
jax: 0.10.0
libtpu: 0.0.40
codegen_flags: <defaults>
</compile_context>

<pallas_src>
import functools

import jax
import jax.numpy as jnp
import numpy as np
from jax import lax
from jax.experimental import pallas as pl
from jax.experimental.pallas import tpu as pltpu

NEG_INF = float("-inf")


def _pick_tile(n, target):
    """Largest tile <= target dividing n, preferring 256/128-aligned tiles
    (full MXU pushes, unmasked lane-dense stores), then 16/8 (packed-sublane /
    sublane alignment).  Falls back to the full extent."""
    if n <= target:
        return n
    for align in (256, 128, 16, 8):
        t = (target // align) * align
        while t >= align:
            if n % t == 0:
                return t
            t -= align
    return n


def _proj_kernel(mixw_ref, *refs, num_layers, hidden_size, negative_slope):
    """ScalarMix + fused src/tgt Linear + LeakyReLU + bilinear-weight pre-fold.

    mixw_ref : SMEM (L,) f32   -- gamma * softmax(scalar_mix_weights)
    refs     : L x (1, tm, D) bf16 layer tiles,
               (D, 2*Hd) w_cat bf16, (1, 2*Hd) b_cat f32, (Hd, Hd) w_bil bf16,
               outputs: (1, tm, Hd) h1p bf16, (1, tm, Hd) h2 bf16
    """
    xs = refs[:num_layers]
    w_cat_ref, b_cat_ref, w_bil_ref, h1p_ref, h2_ref = refs[num_layers:]

    # ScalarMix: accumulate the layer-weighted sum in f32 (inputs are bf16).
    mixed = xs[0][0].astype(jnp.float32) * mixw_ref[0]
    for l in range(1, num_layers):
        mixed = mixed + xs[l][0].astype(jnp.float32) * mixw_ref[l]

    # Fused src/tgt projection: a single (tm, D) @ (D, 2*Hd) MXU matmul instead
    # of two half-width ones; bf16 operands, f32 accumulation, f32 bias+LeakyReLU.
    h = jnp.dot(mixed.astype(jnp.bfloat16), w_cat_ref[...],
                preferred_element_type=jnp.float32) + b_cat_ref[...]
    h = jnp.where(h >= 0, h, negative_slope * h)

    h1 = h[:, :hidden_size]
    h2 = h[:, hidden_size:]

    # Fold the bilinear weight into the src side once per row tile:
    #   aligned[q,b,a] = sum_y h2[q,b,y] * (h1 @ W_bil)[q,a,y]
    h1p = jnp.dot(h1.astype(jnp.bfloat16), w_bil_ref[...],
                  preferred_element_type=jnp.float32)

    h1p_ref[0] = h1p.astype(h1p_ref.dtype)
    h2_ref[0] = h2.astype(h2_ref.dtype)


def _bilinear_kernel(h2_ref, h1p_ref, pm_ref, out_ref, *,
                     tile_rows, tile_cols, offset):
    """One (tile_rows, tile_cols) output block of aligned = h2 @ h1p^T + masks.

    Triangular regime per block:
      fully-above  -> skip the matmul, store -inf fill
      fully-below  -> matmul + pointer-mask (col-0 fix only in the j==0 tile)
      diagonal     -> matmul + collapsed tril & pointer-mask select + col-0 fix
    """
    i = pl.program_id(1)
    j = pl.program_id(2)
    row_start = i * tile_rows          # global row offset of this block
    col_start = j * tile_cols          # global col offset of this block

    # Kept region is cols <= row + offset (offset = -1: strict lower triangle).
    fully_above = col_start > row_start + (tile_rows - 1) + offset
    fully_below = col_start + (tile_cols - 1) <= row_start + offset

    @pl.when(fully_above)
    def _():
        out_ref[0] = jnp.full((tile_rows, tile_cols), NEG_INF, out_ref.dtype)

    @pl.when(jnp.logical_not(fully_above))
    def _():
        # scores[b, a] = sum_y h2[b, y] * h1p[a, y]  (q @ k^T pattern; Mosaic
        # feeds the transposed operand natively, f32 accumulation).
        scores = lax.dot_general(h2_ref[0], h1p_ref[0],
                                 (((1,), (1,)), ((), ())),
                                 preferred_element_type=jnp.float32)
        pm = pm_ref[0] > 0             # (tile_rows, 1) pointer-masked rows

        @pl.when(fully_below)
        def _():
            a = jnp.where(pm, NEG_INF, scores)

            @pl.when(j == 0)           # column 0 lives only in the first tile
            def _():
                c0 = lax.broadcasted_iota(jnp.int32, scores.shape, 1) == 0
                out_ref[0] = jnp.where(jnp.logical_and(pm, c0), 0.0,
                                       a).astype(out_ref.dtype)

            @pl.when(j > 0)
            def _():
                out_ref[0] = a.astype(out_ref.dtype)

        @pl.when(jnp.logical_not(fully_below))
        def _():
            # Diagonal-crossing block: single collapsed keep-select, then the
            # pointer-mask col-0 fix (col == 0 is only reachable when j == 0).
            row = lax.broadcasted_iota(jnp.int32, scores.shape, 0) + row_start
            col = lax.broadcasted_iota(jnp.int32, scores.shape, 1) + col_start
            keep = jnp.logical_and(col <= row + offset, jnp.logical_not(pm))
            a = jnp.where(keep, scores, NEG_INF)
            a = jnp.where(jnp.logical_and(pm, col == 0), 0.0, a)
            out_ref[0] = a.astype(out_ref.dtype)


def bilinear_aligner_forward(decoder_hidden_states, mix_scalars, gamma,
                             w_src, b_src, w_tgt, b_tgt, w_bilinear,
                             pointer_mask, *, offset=-1, negative_slope=0.01,
                             row_tile=512, col_tile=512,
                             out_dtype=jnp.float32):
    """Pallas implementation of BilinearAligner.forward (training path).

    decoder_hidden_states: tuple of the last L decoder hidden states, each
    (B, T, D) in their native dtype (bf16 ok).  Weights are (in, out) layout.
    out_dtype: float32 by default; bfloat16 recommended on v5e (halves the
    dominant T^2 output-store traffic; -inf is representable in bf16).
    """
    num_layers = len(decoder_hidden_states)
    B, T, D = decoder_hidden_states[0].shape
    Hd = w_src.shape[1]
    assert w_src.shape == (D, Hd) and w_tgt.shape == (D, Hd)
    assert w_bilinear.shape == (Hd, Hd)

    # ScalarMix normalization: L scalars -> gamma * softmax (tiny, host side).
    mixw = (gamma * jax.nn.softmax(mix_scalars.astype(jnp.float32))
            ).astype(jnp.float32)

    # Fused src/tgt projection weights: one matmul with N = 2*Hd in kernel 1.
    w_cat = jnp.concatenate([w_src, w_tgt], axis=1).astype(jnp.bfloat16)
    b_cat = jnp.concatenate([b_src.reshape(-1), b_tgt.reshape(-1)]
                            ).reshape(1, 2 * Hd).astype(jnp.float32)
    w_bil_b = w_bilinear.astype(jnp.bfloat16)

    tm = _pick_tile(T, row_tile)
    assert T % tm == 0

    # 64 MiB scoped VMEM: well under v5e/v6e's 128 MiB; safe on v7x (64 MiB)
    # because kernel 2 is now column-tiled (nothing full-T resident).
    vmem_limit = 64 * 1024 * 1024
    cparams_proj = pltpu.CompilerParams(
        dimension_semantics=("parallel", "parallel"),
        vmem_limit_bytes=vmem_limit,
    )

    ce1 = pl.CostEstimate(
        flops=int(2 * B * T * D * (2 * Hd) + 2 * B * T * Hd * Hd
                  + 2 * num_layers * B * T * D),
        transcendentals=0,
        bytes_accessed=int(num_layers * B * T * D * 2 + D * (2 * Hd) * 2
                           + Hd * Hd * 2 + 2 * B * T * Hd * 2),
    )

    # ---- kernel 1: ScalarMix + fused projections + bilinear pre-fold --------
    proj_kernel = functools.partial(_proj_kernel, num_layers=num_layers,
                                    hidden_size=Hd,
                                    negative_slope=negative_slope)
    x_specs = [pl.BlockSpec((1, tm, D), lambda b, i: (b, i, 0))
               for _ in range(num_layers)]
    smem_spec = pl.BlockSpec(memory_space=pltpu.MemorySpace.SMEM)
    wcat_spec = pl.BlockSpec((D, 2 * Hd), lambda b, i: (0, 0))
    bcat_spec = pl.BlockSpec((1, 2 * Hd), lambda b, i: (0, 0))
    bil_spec = pl.BlockSpec((Hd, Hd), lambda b, i: (0, 0))

    h1p, h2 = pl.pallas_call(
        proj_kernel,
        out_shape=(jax.ShapeDtypeStruct((B, T, Hd), jnp.bfloat16),
                   jax.ShapeDtypeStruct((B, T, Hd), jnp.bfloat16)),
        grid_spec=pltpu.PrefetchScalarGridSpec(
            num_scalar_prefetch=0,
            grid=(B, T // tm),
            in_specs=[smem_spec] + x_specs + [wcat_spec, bcat_spec, bil_spec],
            out_specs=(pl.BlockSpec((1, tm, Hd), lambda b, i: (b, i, 0)),
                       pl.BlockSpec((1, tm, Hd), lambda b, i: (b, i, 0))),
        ),
        compiler_params=cparams_proj,
        cost_estimate=ce1,
    )(mixw, *decoder_hidden_states, w_cat, b_cat, w_bil_b)

    # ---- kernel 2: column-tiled bilinear scores + masking -------------------
    pm = pointer_mask.astype(jnp.int32).reshape(B, T, 1)
    tb = _pick_tile(T, row_tile)
    tc = _pick_tile(T, col_tile)
    assert T % tb == 0 and T % tc == 0

    cparams_bil = pltpu.CompilerParams(
        # Every (b, i, j) writes a distinct output block -> all parallel
        # (shards across both TensorCores on v7x; no-op on v5e/v6e).
        dimension_semantics=("parallel", "parallel", "parallel"),
        vmem_limit_bytes=vmem_limit,
    )
    out_bytes = jnp.dtype(out_dtype).itemsize
    ce2 = pl.CostEstimate(
        flops=int(B * T * T * Hd),          # ~half of dense 2*B*T^2*Hd (tril skip)
        transcendentals=0,
        bytes_accessed=int(B * T * T * out_bytes + 2 * B * T * Hd * 2 + B * T * 4),
    )
    bil_kernel = functools.partial(_bilinear_kernel, tile_rows=tb,
                                   tile_cols=tc, offset=offset)
    aligned = pl.pallas_call(
        bil_kernel,
        out_shape=jax.ShapeDtypeStruct((B, T, T), out_dtype),
        grid_spec=pltpu.PrefetchScalarGridSpec(
            num_scalar_prefetch=0,
            grid=(B, T // tb, T // tc),
            in_specs=[pl.BlockSpec((1, tb, Hd), lambda b, i, j: (b, i, 0)),
                      pl.BlockSpec((1, tc, Hd), lambda b, i, j: (b, j, 0)),
                      pl.BlockSpec((1, tb, 1), lambda b, i, j: (b, i, 0))],
            out_specs=pl.BlockSpec((1, tb, tc), lambda b, i, j: (b, i, j)),
        ),
        compiler_params=cparams_bil,
        cost_estimate=ce2,
    )(h2, h1p, pm)
    return aligned


def _reference_numpy(decoder_hidden_states, mix_scalars, gamma, w_src, b_src,
                     w_tgt, b_tgt, w_bilinear, pointer_mask,
                     offset=-1, negative_slope=0.01):
    """float64 numpy mirror of the PyTorch forward (non-generating path), with
    the same mixed-precision policy as the kernel (bf16 MXU operands, >=f32
    accumulation/bias/activation, bf16 intermediates)."""
    def f64(x):
        return np.asarray(x).astype(np.float64)

    def bf16(x):
        return np.asarray(x).astype(jnp.bfloat16).astype(np.float64)

    xs = [f64(h) for h in decoder_hidden_states]   # bf16 inputs -> exact
    s = f64(mix_scalars)
    w = np.exp(s - s.max())
    w = w / w.sum()
    mixed = float(np.asarray(gamma)) * sum(w[l] * xs[l] for l in range(len(xs)))

    def lrelu(x):
        return np.where(x >= 0, x, negative_slope * x)

    mixed_bf = bf16(mixed)
    h1 = lrelu(mixed_bf @ f64(w_src) + f64(b_src))
    h2 = lrelu(mixed_bf @ f64(w_tgt) + f64(b_tgt))
    h1p = bf16(h1) @ f64(w_bilinear)               # pre-fold of W_bil
    h1p, h2 = bf16(h1p), bf16(h2)                  # bf16 intermediates
    # aligned[q,b,a] = sum_y h2[q,b,y] * h1p[q,a,y]  ( == 'qax,xy,qby->qba' )
    aligned = np.einsum('qby,qay->qba', h2, h1p)

    _, T, _ = aligned.shape
    rows = np.arange(T)[:, None]
    cols = np.arange(T)[None, :]
    aligned = np.where((cols <= rows + offset)[None], aligned, -np.inf)
    pmask = np.asarray(pointer_mask).astype(bool)[:, :, None]
    aligned = np.where(pmask, -np.inf, aligned)
    col0 = (np.arange(T) == 0)[None, None, :]
    aligned = np.where(pmask & col0, 0.0, aligned)
    return aligned


if __name__ == "__main__":
    key = jax.random.PRNGKey(0)
    # T=384 with 128-wide row/col tiles -> a 3x3 block grid per batch element,
    # exercising all three triangular regimes (skip / below / diagonal) plus
    # the j==0 / j>0 pointer-mask paths, while staying small.
    B, T, D, Hd, L = 2, 384, 32, 32, 3   # batch, seq, input_size, hidden_size, bart_layers

    keys = jax.random.split(key, L + 7)
    # Last L decoder hidden states, in the model's native bf16.
    decoder_hidden_states = tuple(
        jax.random.normal(keys[i], (B, T, D), dtype=jnp.float32).astype(jnp.bfloat16)
        for i in range(L)
    )
    mix_scalars = jax.random.normal(keys[L], (L,), dtype=jnp.float32)
    gamma = jnp.asarray(1.3, dtype=jnp.float32)
    # Projection / bilinear weights in (in, out) layout (== torch W.T), bf16.
    w_src = (jax.random.normal(keys[L + 1], (D, Hd), dtype=jnp.float32)
             / np.sqrt(D)).astype(jnp.bfloat16)
    b_src = jax.random.normal(keys[L + 2], (Hd,), dtype=jnp.float32) * 0.1
    w_tgt = (jax.random.normal(keys[L + 3], (D, Hd), dtype=jnp.float32)
             / np.sqrt(D)).astype(jnp.bfloat16)
    b_tgt = jax.random.normal(keys[L + 4], (Hd,), dtype=jnp.float32) * 0.1
    # nn.Parameter(torch.zeros(...)) in the module; random here so the check is
    # non-trivial.
    w_bilinear = (jax.random.normal(keys[L + 5], (Hd, Hd), dtype=jnp.float32)
                  / np.sqrt(Hd)).astype(jnp.bfloat16)
    pointer_mask = jax.random.uniform(keys[L + 6], (B, T)) < 0.3   # bool (B, T)

    out = bilinear_aligner_forward(decoder_hidden_states, mix_scalars, gamma,
                                   w_src, b_src, w_tgt, b_tgt, w_bilinear,
                                   pointer_mask, row_tile=128, col_tile=128)
    out = jax.block_until_ready(out)

    ref = _reference_numpy(decoder_hidden_states, mix_scalars, gamma,
                           w_src, b_src, w_tgt, b_tgt, w_bilinear, pointer_mask)
    # rtol covers f32-vs-f64 accumulation; atol covers rare one-ulp bf16
    # rounding flips of intermediates (h1/h1p/h2) propagated through the
    # Hd-length dot at near-cancelling scores (-inf / 0.0 entries are exact).
    np.testing.assert_allclose(np.asarray(out), ref, rtol=5e-3, atol=2e-2)

    print("KERNEL_OK")
</pallas_src>

<mosaic_0001>
module attributes {stable_mosaic.version = 11 : i64} {
  func.func @_proj_kernel(%arg0: i32, %arg1: i32, %arg2: memref<3xf32, #tpu.memory_space<smem>>, %arg3: memref<1x128x32xbf16, #tpu.memory_space<vmem>>, %arg4: memref<1x128x32xbf16, #tpu.memory_space<vmem>>, %arg5: memref<1x128x32xbf16, #tpu.memory_space<vmem>>, %arg6: memref<32x64xbf16, #tpu.memory_space<vmem>>, %arg7: memref<1x64xf32, #tpu.memory_space<vmem>>, %arg8: memref<32x32xbf16, #tpu.memory_space<vmem>>, %arg9: memref<1x128x32xbf16, #tpu.memory_space<vmem>>, %arg10: memref<1x128x32xbf16, #tpu.memory_space<vmem>>) attributes {dimension_semantics = [#tpu.dimension_semantics<parallel>, #tpu.dimension_semantics<parallel>], iteration_bounds = array<i64: 2, 3>, scalar_prefetch = 0 : i64, scratch_operands = 0 : i64, tpu.core_type = #tpu.core_type<tc>, window_params = [{transform_indices = @transform_0, window_bounds = array<i64: 3>}, {transform_indices = @transform_1, window_bounds = array<i64: 1, 128, 32>}, {transform_indices = @transform_2, window_bounds = array<i64: 1, 128, 32>}, {transform_indices = @transform_3, window_bounds = array<i64: 1, 128, 32>}, {pipeline_mode = #tpu.pipeline_mode<synchronous>, transform_indices = @transform_4, window_bounds = array<i64: 32, 64>}, {pipeline_mode = #tpu.pipeline_mode<synchronous>, transform_indices = @transform_5, window_bounds = array<i64: 1, 64>}, {pipeline_mode = #tpu.pipeline_mode<synchronous>, transform_indices = @transform_6, window_bounds = array<i64: 32, 32>}, {transform_indices = @transform_7, window_bounds = array<i64: 1, 128, 32>}, {transform_indices = @transform_8, window_bounds = array<i64: 1, 128, 32>}]} {
    %c0 = arith.constant 0 : index
    %c0_0 = arith.constant 0 : index
    %c0_1 = arith.constant 0 : index
    %0 = vector.load %arg3[%c0, %c0_0, %c0_1] : memref<1x128x32xbf16, #tpu.memory_space<vmem>>, vector<1x128x32xbf16>
    %1 = vector.shape_cast %0 : vector<1x128x32xbf16> to vector<128x32xbf16>
    %2 = arith.extf %1 : vector<128x32xbf16> to vector<128x32xf32>
    %c0_2 = arith.constant 0 : index
    %3 = memref.load %arg2[%c0_2] : memref<3xf32, #tpu.memory_space<smem>>
    %4 = vector.broadcast %3 : f32 to vector<128x32xf32>
    %5 = arith.mulf %2, %4 : vector<128x32xf32>
    %c0_3 = arith.constant 0 : index
    %c0_4 = arith.constant 0 : index
    %c0_5 = arith.constant 0 : index
    %6 = vector.load %arg4[%c0_3, %c0_4, %c0_5] : memref<1x128x32xbf16, #tpu.memory_space<vmem>>, vector<1x128x32xbf16>
    %7 = vector.shape_cast %6 : vector<1x128x32xbf16> to vector<128x32xbf16>
    %8 = arith.extf %7 : vector<128x32xbf16> to vector<128x32xf32>
    %c1 = arith.constant 1 : index
    %9 = memref.load %arg2[%c1] : memref<3xf32, #tpu.memory_space<smem>>
    %10 = vector.broadcast %9 : f32 to vector<128x32xf32>
    %11 = arith.mulf %8, %10 : vector<128x32xf32>
    %12 = arith.addf %5, %11 : vector<128x32xf32>
    %c0_6 = arith.constant 0 : index
    %c0_7 = arith.constant 0 : index
    %c0_8 = arith.constant 0 : index
    %13 = vector.load %arg5[%c0_6, %c0_7, %c0_8] : memref<1x128x32xbf16, #tpu.memory_space<vmem>>, vector<1x128x32xbf16>
    %14 = vector.shape_cast %13 : vector<1x128x32xbf16> to vector<128x32xbf16>
    %15 = arith.extf %14 : vector<128x32xbf16> to vector<128x32xf32>
    %c2 = arith.constant 2 : index
    %16 = memref.load %arg2[%c2] : memref<3xf32, #tpu.memory_space<smem>>
    %17 = vector.broadcast %16 : f32 to vector<128x32xf32>
    %18 = arith.mulf %15, %17 : vector<128x32xf32>
    %19 = arith.addf %12, %18 : vector<128x32xf32>
    %20 = arith.truncf %19 : vector<128x32xf32> to vector<128x32xbf16>
    %c0_9 = arith.constant 0 : index
    %c0_10 = arith.constant 0 : index
    %21 = vector.load %arg6[%c0_9, %c0_10] : memref<32x64xbf16, #tpu.memory_space<vmem>>, vector<32x64xbf16>
    %cst = arith.constant dense<0.000000e+00> : vector<128x64xf32>
    %22 = tpu.matmul %20, %21, %cst {dimension_numbers = #tpu.dot_dimension_numbers<[1], [0], [0], [1], [0, 0, 1, 1], [], []>} : vector<128x32xbf16>, vector<32x64xbf16>, vector<128x64xf32> -> vector<128x64xf32>
    %c0_11 = arith.constant 0 : index
    %c0_12 = arith.constant 0 : index
    %23 = vector.load %arg7[%c0_11, %c0_12] : memref<1x64xf32, #tpu.memory_space<vmem>>, vector<1x64xf32>
    %24 = vector.broadcast %23 : vector<1x64xf32> to vector<128x64xf32>
    %25 = arith.addf %22, %24 : vector<128x64xf32>
    %cst_13 = arith.constant 0.000000e+00 : f32
    %26 = vector.broadcast %cst_13 : f32 to vector<128x64xf32>
    %27 = arith.cmpf oge, %25, %26 : vector<128x64xf32>
    %cst_14 = arith.constant 0.00999999977 : f32
    %28 = vector.broadcast %cst_14 : f32 to vector<128x64xf32>
    %29 = arith.mulf %28, %25 : vector<128x64xf32>
    %30 = arith.select %27, %25, %29 : vector<128x64xi1>, vector<128x64xf32>
    %31 = vector.extract_strided_slice %30 {offsets = [0, 0], sizes = [128, 32], strides = [1, 1]} : vector<128x64xf32> to vector<128x32xf32>
    %32 = vector.extract_strided_slice %30 {offsets = [0, 32], sizes = [128, 32], strides = [1, 1]} : vector<128x64xf32> to vector<128x32xf32>
    %33 = arith.truncf %31 : vector<128x32xf32> to vector<128x32xbf16>
    %c0_15 = arith.constant 0 : index
    %c0_16 = arith.constant 0 : index
    %34 = vector.load %arg8[%c0_15, %c0_16] : memref<32x32xbf16, #tpu.memory_space<vmem>>, vector<32x32xbf16>
    %cst_17 = arith.constant dense<0.000000e+00> : vector<128x32xf32>
    %35 = tpu.matmul %33, %34, %cst_17 {dimension_numbers = #tpu.dot_dimension_numbers<[1], [0], [0], [1], [0, 0, 1, 1], [], []>} : vector<128x32xbf16>, vector<32x32xbf16>, vector<128x32xf32> -> vector<128x32xf32>
    %36 = arith.truncf %35 : vector<128x32xf32> to vector<128x32xbf16>
    %c0_18 = arith.constant 0 : index
    %c0_19 = arith.constant 0 : index
    %c0_20 = arith.constant 0 : index
    %37 = vector.load %arg9[%c0_18, %c0_19, %c0_20] : memref<1x128x32xbf16, #tpu.memory_space<vmem>>, vector<1x128x32xbf16>
    %38 = vector.shape_cast %37 : vector<1x128x32xbf16> to vector<128x32xbf16>
    %39 = vector.shape_cast %36 : vector<128x32xbf16> to vector<1x128x32xbf16>
    tpu.vector_store %arg9[%c0_18, %c0_19, %c0_20], %39 {strides = array<i32>} : memref<1x128x32xbf16, #tpu.memory_space<vmem>>, vector<1x128x32xbf16>,
    %40 = arith.truncf %32 : vector<128x32xf32> to vector<128x32xbf16>
    %c0_21 = arith.constant 0 : index
    %c0_22 = arith.constant 0 : index
    %c0_23 = arith.constant 0 : index
    %41 = vector.load %arg10[%c0_21, %c0_22, %c0_23] : memref<1x128x32xbf16, #tpu.memory_space<vmem>>, vector<1x128x32xbf16>
    %42 = vector.shape_cast %41 : vector<1x128x32xbf16> to vector<128x32xbf16>
    %43 = vector.shape_cast %40 : vector<128x32xbf16> to vector<1x128x32xbf16>
    tpu.vector_store %arg10[%c0_21, %c0_22, %c0_23], %43 {strides = array<i32>} : memref<1x128x32xbf16, #tpu.memory_space<vmem>>, vector<1x128x32xbf16>,
    return
  }
  func.func @transform_0(%arg0: i32, %arg1: i32) -> i32 {
    %c0_i32 = arith.constant 0 : i32
    %c0_i32_0 = arith.constant 0 : i32
    return %c0_i32 : i32
  }
  func.func @transform_1(%arg0: i32, %arg1: i32) -> (i32, i32, i32) {
    %c0_i32 = arith.constant 0 : i32
    %c0_i32_0 = arith.constant 0 : i32
    return %arg0, %arg1, %c0_i32 : i32, i32, i32
  }
  func.func @transform_2(%arg0: i32, %arg1: i32) -> (i32, i32, i32) {
    %c0_i32 = arith.constant 0 : i32
    %c0_i32_0 = arith.constant 0 : i32
    return %arg0, %arg1, %c0_i32 : i32, i32, i32
  }
  func.func @transform_3(%arg0: i32, %arg1: i32) -> (i32, i32, i32) {
    %c0_i32 = arith.constant 0 : i32
    %c0_i32_0 = arith.constant 0 : i32
    return %arg0, %arg1, %c0_i32 : i32, i32, i32
  }
  func.func @transform_4(%arg0: i32, %arg1: i32) -> (i32, i32) {
    %c0_i32 = arith.constant 0 : i32
    %c0_i32_0 = arith.constant 0 : i32
    %c0_i32_1 = arith.constant 0 : i32
    return %c0_i32, %c0_i32_0 : i32, i32
  }
  func.func @transform_5(%arg0: i32, %arg1: i32) -> (i32, i32) {
    %c0_i32 = arith.constant 0 : i32
    %c0_i32_0 = arith.constant 0 : i32
    %c0_i32_1 = arith.constant 0 : i32
    return %c0_i32, %c0_i32_0 : i32, i32
  }
  func.func @transform_6(%arg0: i32, %arg1: i32) -> (i32, i32) {
    %c0_i32 = arith.constant 0 : i32
    %c0_i32_0 = arith.constant 0 : i32
    %c0_i32_1 = arith.constant 0 : i32
    return %c0_i32, %c0_i32_0 : i32, i32
  }
  func.func @transform_7(%arg0: i32, %arg1: i32) -> (i32, i32, i32) {
    %c0_i32 = arith.constant 0 : i32
    %c0_i32_0 = arith.constant 0 : i32
    return %arg0, %arg1, %c0_i32 : i32, i32, i32
  }
  func.func @transform_8(%arg0: i32, %arg1: i32) -> (i32, i32, i32) {
    %c0_i32 = arith.constant 0 : i32
    %c0_i32_0 = arith.constant 0 : i32
    return %arg0, %arg1, %c0_i32 : i32, i32, i32
  }
}

</mosaic_0001>

<llo_original>
// kernel: tpu_custom_call.1
$region0: #{tpu_custom_call.1}
  #allocation0 [shape = 'u32[]', space=smem, size = 0x4, offset = 0x4, fixed_abs, tag = 'smem constant byte address 0x4 - core index']
  #allocation1 [shape = 'u32[144,128]{1,0:T(1,128)}', space=vmem, size = 0x12000, scoped, tag = 'internal scratch']
  %s0 = inlined_call_operand.hbm [shape: f32[3], index: 0, kind: input, shape index: {}]
  %s1 = inlined_call_operand.hbm [shape: bf16[2,384,32], index: 1, kind: input, shape index: {}]
  %s2 = inlined_call_operand.hbm [shape: bf16[2,384,32], index: 2, kind: input, shape index: {}]
  %s3 = inlined_call_operand.hbm [shape: bf16[2,384,32], index: 3, kind: input, shape index: {}]
  %s4 = inlined_call_operand.hbm [shape: bf16[32,64], index: 4, kind: input, shape index: {}]
  %s5 = inlined_call_operand.hbm [shape: f32[1,64], index: 5, kind: input, shape index: {}]
  %s6 = inlined_call_operand.hbm [shape: bf16[32,32], index: 6, kind: input, shape index: {}]
  %s7 = inlined_call_operand.hbm [shape: bf16[2,384,32], index: 7, kind: output, shape index: {0}]
  %s8 = inlined_call_operand.hbm [shape: bf16[2,384,32], index: 8, kind: output, shape index: {1}]
  %9 = xla_tuple %s7, %s8
  %s10 = sld [smem:[#allocation0]]
  $region97: #{tpu_custom_call.1} parent=0
    _
  %s12 = ssub.s32 1, %s10
  %s13 = scalar_select 0, %s12, %s10
  $region1: #{tpu_custom_call.1} parent=0
    #allocation2 [shape = 'u8[512]{0}', space=smem, size = 0x200, scoped, tag = 'input window, operand 0, single buffered']
    #allocation3 [shape = 's32[2]{0}', space=sflag, size = 0x8, scoped, tag = 'scoped memory for tpu_custom_call.1']
    #allocation4 [shape = 's32[2]{0}', space=sflag, size = 0x8, scoped, tag = 'scoped memory for tpu_custom_call.1']
    #allocation5 [shape = 's32[2]{0}', space=sflag, size = 0x8, scoped, tag = 'scoped memory for tpu_custom_call.1']
    #allocation6 [shape = 'u8[65536]{0}', space=vmem, size = 0x10000, scoped, tag = 'input window, operand 1']
    #allocation7 [shape = 'u8[65536]{0}', space=vmem, size = 0x10000, scoped, tag = 'input window, operand 2']
    #allocation8 [shape = 's32[2]{0}', space=sflag, size = 0x8, scoped, tag = 'scoped memory for tpu_custom_call.1']
    #allocation9 [shape = 'u8[65536]{0}', space=vmem, size = 0x10000, scoped, tag = 'input window, operand 3']
    #allocation10 [shape = 'u8[8192]{0}', space=vmem, size = 0x2000, scoped, tag = 'input window, operand 4, single buffered']
    #allocation11 [shape = 's32[1]{0}', space=sflag, size = 0x4, scoped, tag = 'scoped memory for tpu_custom_call.1']
    #allocation12 [shape = 'u8[512]{0}', space=vmem, size = 0x400, scoped, tag = 'input window, operand 5, single buffered']
    #allocation13 [shape = 'u8[8192]{0}', space=vmem, size = 0x2000, scoped, tag = 'input window, operand 6, single buffered']
    #allocation14 [shape = 's32[1]{0}', space=sflag, size = 0x4, scoped, tag = 'scoped memory for tpu_custom_call.1']
    #allocation15 [shape = 'u8[65536]{0}', space=vmem, size = 0x10000, scoped, tag = 'output window, operand 0']
    #allocation16 [shape = 'u8[65536]{0}', space=vmem, size = 0x10000, scoped, tag = 'output window, operand 1']
    #allocation17 [shape = 's32[2]{0}', space=sflag, size = 0x8, scoped, tag = 'scoped memory for tpu_custom_call.1']
    %14 = vsyncpa [#allocation5], 0
    %15 = vsyncpa [#allocation3], 0
    %s16 = scalar_lea.sflag [#allocation3], 1
    %17 = vsyncpa %s16, 0
    %18 = vsyncpa [#allocation8], 0
    %s19 = scalar_lea.sflag [#allocation8], 1
    %20 = vsyncpa %s19, 0
    %21 = vsyncpa [#allocation11], 0
    %22 = vsyncpa [#allocation14], 0
    %23 = vsyncpa [#allocation4], 0
    %s24 = scalar_lea.sflag [#allocation4], 1
    %25 = vsyncpa %s24, 0
    %26 = vsyncpa [#allocation17], 0
    %s27 = scalar_lea.sflag [#allocation17], 1
    %28 = vsyncpa %s27, 0
    loop: start=0, step=1, limit=8
    $region2: #{tpu_custom_call.1} parent=1 // loop_pre_header
      _
    $region3: #{tpu_custom_call.1} parent=1 // loop_header
      %s30 = sphi 0, %s34
      %p31 = scmp.ge.s32.totalorder %s30, 8
      %s37 = sphi 0, %s49
      %s38 = sphi 0, %s45
      %s39 = sphi 0, %s37
      %s40 = sphi 0, %s38
      %s41 = sphi 0, %s39
      %s42 = sphi 0, %s40
      %s50 = sphi 0, %s50
      %s52 = sphi 0, %s50
      %s53 = sphi 0, %s52
      %s67 = sphi 0, %s53
      %s75 = sphi 0, %s77
      %s78 = sphi 0, %s75
      %s79 = sphi 0, %s78
      %s95 = sphi 0, %s79
      %s103 = sphi 0, %s105
      %s106 = sphi 0, %s103
      %s107 = sphi 0, %s106
      %s123 = sphi 0, %s107
      %s131 = sphi 0, %s133
      %s134 = sphi 0, %s131
      %s135 = sphi 0, %s134
      %s151 = sphi 0, %s135
      %s155 = sphi 0, %s155
      %s157 = sphi 0, %s155
      %s158 = sphi 0, %s157
      %s172 = sphi 0, %s158
      %s176 = sphi 0, %s176
      %s178 = sphi 0, %s176
      %s179 = sphi 0, %s178
      %s193 = sphi 0, %s179
      %s197 = sphi 0, %s197
      %s199 = sphi 0, %s197
      %s200 = sphi 0, %s199
      %s214 = sphi 0, %s200
      %s222 = sphi 0, %s224
      %s225 = sphi 0, %s222
      %s226 = sphi 0, %s225
      %s242 = sphi 0, %s226
      %s250 = sphi 0, %s252
      %s253 = sphi 0, %s250
      %s254 = sphi 0, %s253
      %s270 = sphi 0, %s254
    $region4: #{tpu_custom_call.1} parent=1 // loop_header_branch
      %33 = sbr.rel (%p31) target = $region8
    $region5: #{tpu_custom_call.1} parent=1 // loop_body
      %s35 = ssub.s32 %s30, 1
      %s36 = ssub.s32 %s30, 2
      %s43 = sadd.s32 1, %s38
      %p44 = scmp.ge.s32.totalorder %s43, 3
      %s45 = scalar_select %p44, 0, %s43
      %s46 = sadd.s32 1, %s37
      %s47 = scalar_select %p44, %s46, %s37
      %p48 = scmp.ge.s32.totalorder %s47, 2
      %s49 = scalar_select %p48, 0, %s47
      %s51 = sadd.s32 %s50, 1
      %p54 = scmp.eq.s32.totalorder %s30, 5
      %p55 = scmp.ne.s32.totalorder %s50, %s52
      %p56 = scmp.eq.s32.totalorder %s30, 0
      %p57 = por %p55, %p56
      %p58 = scmp.ne.s32.totalorder %s50, %s52
      %p59 = scmp.eq.s32.totalorder %s35, 5
      %p60 = por %p58, %p59
      %p61 = scmp.ne.s32.totalorder %s52, %s53
      %p62 = scmp.eq.s32.totalorder %s35, 0
      %p63 = por %p61, %p62
      %p64 = scmp.ne.s32.totalorder %s52, %s53
      %p65 = scmp.eq.s32.totalorder %s36, 5
      %p66 = por %p64, %p65
      %p68 = scmp.ne.s32.totalorder %s53, %s67
      %p69 = scmp.eq.s32.totalorder %s36, 0
      %p70 = por %p68, %p69
      %s71 = ssub.s32 %s37, %s49
      %s72 = ssub.s32 %s38, %s45
      %s73 = sor.u32 %s71, %s72
      %p74 = scmp.eq.s32.totalorder %s73, 0
      %s76 = sadd.s32 %s75, 1
      %s77 = scalar_select %p74, %s75, %s76
      %p80 = pneg %p74
      %p81 = scmp.eq.s32.totalorder %s30, 5
      %p82 = por %p80, %p81
      %p83 = scmp.ne.s32.totalorder %s75, %s78
      %p84 = scmp.eq.s32.totalorder %s30, 0
      %p85 = por %p83, %p84
      %p86 = scmp.ne.s32.totalorder %s75, %s78
      %p87 = scmp.eq.s32.totalorder %s35, 5
      %p88 = por %p86, %p87
      %p89 = scmp.ne.s32.totalorder %s78, %s79
      %p90 = scmp.eq.s32.totalorder %s35, 0
      %p91 = por %p89, %p90
      %p92 = scmp.ne.s32.totalorder %s78, %s79
      %p93 = scmp.eq.s32.totalorder %s36, 5
      %p94 = por %p92, %p93
      %p96 = scmp.ne.s32.totalorder %s79, %s95
      %p97 = scmp.eq.s32.totalorder %s36, 0
      %p98 = por %p96, %p97
      %s99 = ssub.s32 %s37, %s49
      %s100 = ssub.s32 %s38, %s45
      %s101 = sor.u32 %s99, %s100
      %p102 = scmp.eq.s32.totalorder %s101, 0
      %s104 = sadd.s32 %s103, 1
      %s105 = scalar_select %p102, %s103, %s104
      %p108 = pneg %p102
      %p109 = scmp.eq.s32.totalorder %s30, 5
      %p110 = por %p108, %p109
      %p111 = scmp.ne.s32.totalorder %s103, %s106
      %p112 = scmp.eq.s32.totalorder %s30, 0
      %p113 = por %p111, %p112
      %p114 = scmp.ne.s32.totalorder %s103, %s106
      %p115 = scmp.eq.s32.totalorder %s35, 5
      %p116 = por %p114, %p115
      %p117 = scmp.ne.s32.totalorder %s106, %s107
      %p118 = scmp.eq.s32.totalorder %s35, 0
      %p119 = por %p117, %p118
      %p120 = scmp.ne.s32.totalorder %s106, %s107
      %p121 = scmp.eq.s32.totalorder %s36, 5
      %p122 = por %p120, %p121
      %p124 = scmp.ne.s32.totalorder %s107, %s123
      %p125 = scmp.eq.s32.totalorder %s36, 0
      %p126 = por %p124, %p125
      %s127 = ssub.s32 %s37, %s49
      %s128 = ssub.s32 %s38, %s45
      %s129 = sor.u32 %s127, %s128
      %p130 = scmp.eq.s32.totalorder %s129, 0
      %s132 = sadd.s32 %s131, 1
      %s133 = scalar_select %p130, %s131, %s132
      %p136 = pneg %p130
      %p137 = scmp.eq.s32.totalorder %s30, 5
      %p138 = por %p136, %p137
      %p139 = scmp.ne.s32.totalorder %s131, %s134
      %p140 = scmp.eq.s32.totalorder %s30, 0
      %p141 = por %p139, %p140
      %p142 = scmp.ne.s32.totalorder %s131, %s134
      %p143 = scmp.eq.s32.totalorder %s35, 5
      %p144 = por %p142, %p143
      %p145 = scmp.ne.s32.totalorder %s134, %s135
      %p146 = scmp.eq.s32.totalorder %s35, 0
      %p147 = por %p145, %p146
      %p148 = scmp.ne.s32.totalorder %s134, %s135
      %p149 = scmp.eq.s32.totalorder %s36, 5
      %p150 = por %p148, %p149
      %p152 = scmp.ne.s32.totalorder %s135, %s151
      %p153 = scmp.eq.s32.totalorder %s36, 0
      %p154 = por %p152, %p153
      %s156 = sadd.s32 %s155, 1
      %p159 = scmp.eq.s32.totalorder %s30, 5
      %p160 = scmp.ne.s32.totalorder %s155, %s157
      %p161 = scmp.eq.s32.totalorder %s30, 0
      %p162 = por %p160, %p161
      %p163 = scmp.ne.s32.totalorder %s155, %s157
      %p164 = scmp.eq.s32.totalorder %s35, 5
      %p165 = por %p163, %p164
      %p166 = scmp.ne.s32.totalorder %s157, %s158
      %p167 = scmp.eq.s32.totalorder %s35, 0
      %p168 = por %p166, %p167
      %p169 = scmp.ne.s32.totalorder %s157, %s158
      %p170 = scmp.eq.s32.totalorder %s36, 5
      %p171 = por %p169, %p170
      %p173 = scmp.ne.s32.totalorder %s158, %s172
      %p174 = scmp.eq.s32.totalorder %s36, 0
      %p175 = por %p173, %p174
      %s177 = sadd.s32 %s176, 1
      %p180 = scmp.eq.s32.totalorder %s30, 5
      %p181 = scmp.ne.s32.totalorder %s176, %s178
      %p182 = scmp.eq.s32.totalorder %s30, 0
      %p183 = por %p181, %p182
      %p184 = scmp.ne.s32.totalorder %s176, %s178
      %p185 = scmp.eq.s32.totalorder %s35, 5
      %p186 = por %p184, %p185
      %p187 = scmp.ne.s32.totalorder %s178, %s179
      %p188 = scmp.eq.s32.totalorder %s35, 0
      %p189 = por %p187, %p188
      %p190 = scmp.ne.s32.totalorder %s178, %s179
      %p191 = scmp.eq.s32.totalorder %s36, 5
      %p192 = por %p190, %p191
      %p194 = scmp.ne.s32.totalorder %s179, %s193
      %p195 = scmp.eq.s32.totalorder %s36, 0
      %p196 = por %p194, %p195
      %s198 = sadd.s32 %s197, 1
      %p201 = scmp.eq.s32.totalorder %s30, 5
      %p202 = scmp.ne.s32.totalorder %s197, %s199
      %p203 = scmp.eq.s32.totalorder %s30, 0
      %p204 = por %p202, %p203
      %p205 = scmp.ne.s32.totalorder %s197, %s199
      %p206 = scmp.eq.s32.totalorder %s35, 5
      %p207 = por %p205, %p206
      %p208 = scmp.ne.s32.totalorder %s199, %s200
      %p209 = scmp.eq.s32.totalorder %s35, 0
      %p210 = por %p208, %p209
      %p211 = scmp.ne.s32.totalorder %s199, %s200
      %p212 = scmp.eq.s32.totalorder %s36, 5
      %p213 = por %p211, %p212
      %p215 = scmp.ne.s32.totalorder %s200, %s214
      %p216 = scmp.eq.s32.totalorder %s36, 0
      %p217 = por %p215, %p216
      %s218 = ssub.s32 %s37, %s49
      %s219 = ssub.s32 %s38, %s45
      %s220 = sor.u32 %s218, %s219
      %p221 = scmp.eq.s32.totalorder %s220, 0
      %s223 = sadd.s32 %s222, 1
      %s224 = scalar_select %p221, %s222, %s223
      %p227 = pneg %p221
      %p228 = scmp.eq.s32.totalorder %s30, 5
      %p229 = por %p227, %p228
      %p230 = scmp.ne.s32.totalorder %s222, %s225
      %p231 = scmp.eq.s32.totalorder %s30, 0
      %p232 = por %p230, %p231
      %p233 = scmp.ne.s32.totalorder %s222, %s225
      %p234 = scmp.eq.s32.totalorder %s35, 5
      %p235 = por %p233, %p234
      %p236 = scmp.ne.s32.totalorder %s225, %s226
      %p237 = scmp.eq.s32.totalorder %s35, 0
      %p238 = por %p236, %p237
      %p239 = scmp.ne.s32.totalorder %s225, %s226
      %p240 = scmp.eq.s32.totalorder %s36, 5
      %p241 = por %p239, %p240
      %p243 = scmp.ne.s32.totalorder %s226, %s242
      %p244 = scmp.eq.s32.totalorder %s36, 0
      %p245 = por %p243, %p244
      %s246 = ssub.s32 %s37, %s49
      %s247 = ssub.s32 %s38, %s45
      %s248 = sor.u32 %s246, %s247
      %p249 = scmp.eq.s32.totalorder %s248, 0
      %s251 = sadd.s32 %s250, 1
      %s252 = scalar_select %p249, %s250, %s251
      %p255 = pneg %p249
      %p256 = scmp.eq.s32.totalorder %s30, 5
      %p257 = por %p255, %p256
      %p258 = scmp.ne.s32.totalorder %s250, %s253
      %p259 = scmp.eq.s32.totalorder %s30, 0
      %p260 = por %p258, %p259
      %p261 = scmp.ne.s32.totalorder %s250, %s253
      %p262 = scmp.eq.s32.totalorder %s35, 5
      %p263 = por %p261, %p262
      %p264 = scmp.ne.s32.totalorder %s253, %s254
      %p265 = scmp.eq.s32.totalorder %s35, 0
      %p266 = por %p264, %p265
      %p267 = scmp.ne.s32.totalorder %s253, %s254
      %p268 = scmp.eq.s32.totalorder %s36, 5
      %p269 = por %p267, %p268
      %p271 = scmp.ne.s32.totalorder %s254, %s270
      %p272 = scmp.eq.s32.totalorder %s36, 0
      %p273 = por %p271, %p272
      %p274 = scmp.le.s32.totalorder 1, %s30
      %p275 = scmp.lt.s32.totalorder %s30, 7
      %p276 = pnand %p274, %p275
      %p277 = pneg %p276
      // Predicated region
      $region9: #{tpu_custom_call.1} parent=5 // pred_check
        _
      $region10: #{tpu_custom_call.1} parent=5 // pred_check_branch
        %279 = sbr.rel (%p276) target = $region12
      $region11: #{tpu_custom_call.1} parent=5 // pred_region
        %s280 = ssub.s32 %s30, 1
        // Predicated region
        $region13: #{tpu_custom_call.1} parent=11 // pred_check
          %p281 = pneg %p63
        $region14: #{tpu_custom_call.1} parent=11 // pred_check_branch
          %283 = sbr.rel (%p281) target = $region16
        $region15: #{tpu_custom_call.1} parent=11 // pred_region
          %s285 = ssub.s32 16, 16
          %286 = vsyncadd [#allocation5], %s285
          %289 = dma.hbm_to_smem %s0, 16, [#allocation2], [#allocation5]
        $region16: #{tpu_custom_call.1} parent=11 // pred_fallthru
          _
        // Predicated region
        $region17: #{tpu_custom_call.1} parent=11 // pred_check
          %p290 = pneg %p168
        $region18: #{tpu_custom_call.1} parent=11 // pred_check_branch
          %292 = sbr.rel (%p290) target = $region20
        $region19: #{tpu_custom_call.1} parent=11 // pred_region
          %s294 = ssub.s32 256, 256
          %295 = vsyncadd [#allocation11], %s294
          %s296 = sshll.u32 [#allocation10], 4
          %s297 = int_to_ptr.vmem [resolvable:$true] %s296
          %302 = dma.hbm_to_vmem [thread:$0]  %s4, 256, %s297, [#allocation11], 64, 64, 4
        $region20: #{tpu_custom_call.1} parent=11 // pred_fallthru
          _
        // Predicated region
        $region21: #{tpu_custom_call.1} parent=11 // pred_check
          %p303 = pneg %p189
        $region22: #{tpu_custom_call.1} parent=11 // pred_check_branch
          %305 = sbr.rel (%p303) target = $region24
        $region23: #{tpu_custom_call.1} parent=11 // pred_region
          %s307 = ssub.s32 16, 16
          %308 = vsyncadd [#allocation11], %s307
          %s310 = sshll.u32 [#allocation12], 4
          %s311 = int_to_ptr.vmem [resolvable:$true] %s310
          %313 = dma.hbm_to_vmem [thread:$0]  %s5, 16, %s311, [#allocation11]
        $region24: #{tpu_custom_call.1} parent=11 // pred_fallthru
          _
        // Predicated region
        $region25: #{tpu_custom_call.1} parent=11 // pred_check
          %p314 = pneg %p210
        $region26: #{tpu_custom_call.1} parent=11 // pred_check_branch
          %316 = sbr.rel (%p314) target = $region28
        $region27: #{tpu_custom_call.1} parent=11 // pred_region
          %s318 = ssub.s32 256, 256
          %319 = vsyncadd [#allocation14], %s318
          %s320 = sshll.u32 [#allocation13], 4
          %s321 = int_to_ptr.vmem [resolvable:$true] %s320
          %326 = dma.hbm_to_vmem [thread:$0]  %s6, 256, %s321, [#allocation14], 64, 64, 4
        $region28: #{tpu_custom_call.1} parent=11 // pred_fallthru
          _
      $region12: #{tpu_custom_call.1} parent=5 // pred_fallthru
        _
      %p327 = scmp.lt.s32.totalorder %s30, 6
      // Predicated region
      $region29: #{tpu_custom_call.1} parent=5 // pred_check
        %p328 = pneg %p327
      $region30: #{tpu_custom_call.1} parent=5 // pred_check_branch
        %330 = sbr.rel (%p328) target = $region32
      $region31: #{tpu_custom_call.1} parent=5 // pred_region
        // Predicated region
        $region33: #{tpu_custom_call.1} parent=31 // pred_check
          %p331 = pneg %p85
        $region34: #{tpu_custom_call.1} parent=31 // pred_check_branch
          %333 = sbr.rel (%p331) target = $region36
        $region35: #{tpu_custom_call.1} parent=31 // pred_region
          %s334 = sand.u32 %s75, 1
          %s335 = scalar_lea.sflag [#allocation3], %s334
          %s336 = sand.u32 %s75, 1
          %s337 = smul.addr %s336, 64
          %s338 = scalar_lea.vmem [#allocation6], %s337
          %s339 = smul.u32 16, %s38
          %s341 = ssub.s32 1024, 1024
          %342 = vsyncadd %s335, %s341
          %s343 = smul.addr %s37, 48
          %s344 = sadd.s32 %s339, %s343
          %s345 = smul.addr %s344, 64
          %s346 = scalar_lea.hbm %s1, %s345
          %s347 = sshll.u32 %s338, 4
          %s348 = int_to_ptr.vmem [resolvable:$true] %s347
          %353 = dma.hbm_to_vmem [thread:$0]  %s346, 1024, %s348, %s335, 64, 64, 4
        $region36: #{tpu_custom_call.1} parent=31 // pred_fallthru
          _
        // Predicated region
        $region37: #{tpu_custom_call.1} parent=31 // pred_check
          %p354 = pneg %p113
        $region38: #{tpu_custom_call.1} parent=31 // pred_check_branch
          %356 = sbr.rel (%p354) target = $region40
        $region39: #{tpu_custom_call.1} parent=31 // pred_region
          %s357 = sand.u32 %s30, 1
          %s358 = scalar_lea.sflag [#allocation8], %s357
          %s359 = sand.u32 %s103, 1
          %s360 = smul.addr %s359, 64
          %s361 = scalar_lea.vmem [#allocation7], %s360
          %s362 = smul.u32 16, %s38
          %s364 = ssub.s32 1024, 1024
          %365 = vsyncadd %s358, %s364
          %s366 = smul.addr %s37, 48
          %s367 = sadd.s32 %s362, %s366
          %s368 = smul.addr %s367, 64
          %s369 = scalar_lea.hbm %s2, %s368
          %s370 = sshll.u32 %s361, 4
          %s371 = int_to_ptr.vmem [resolvable:$true] %s370
          %376 = dma.hbm_to_vmem [thread:$0]  %s369, 1024, %s371, %s358, 64, 64, 4
        $region40: #{tpu_custom_call.1} parent=31 // pred_fallthru
          _
        // Predicated region
        $region41: #{tpu_custom_call.1} parent=31 // pred_check
          %p377 = pneg %p141
        $region42: #{tpu_custom_call.1} parent=31 // pred_check_branch
          %379 = sbr.rel (%p377) target = $region44
        $region43: #{tpu_custom_call.1} parent=31 // pred_region
          %s380 = sand.u32 %s30, 1
          %s381 = scalar_lea.sflag [#allocation8], %s380
          %s382 = sand.u32 %s131, 1
          %s383 = smul.addr %s382, 64
          %s384 = scalar_lea.vmem [#allocation9], %s383
          %s385 = smul.u32 16, %s38
          %s387 = ssub.s32 1024, 1024
          %388 = vsyncadd %s381, %s387
          %s389 = smul.addr %s37, 48
          %s390 = sadd.s32 %s385, %s389
          %s391 = smul.addr %s390, 64
          %s392 = scalar_lea.hbm %s3, %s391
          %s393 = sshll.u32 %s384, 4
          %s394 = int_to_ptr.vmem [resolvable:$true] %s393
          %399 = dma.hbm_to_vmem [thread:$0]  %s392, 1024, %s394, %s381, 64, 64, 4
        $region44: #{tpu_custom_call.1} parent=31 // pred_fallthru
          _
      $region32: #{tpu_custom_call.1} parent=5 // pred_fallthru
        _
      %p400 = scmp.le.s32.totalorder 1, %s30
      %p401 = scmp.lt.s32.totalorder %s30, 7
      %p402 = pnand %p400, %p401
      %p403 = pneg %p402
      // Predicated region
      $region45: #{tpu_custom_call.1} parent=5 // pred_check
        _
      $region46: #{tpu_custom_call.1} parent=5 // pred_check_branch
        %405 = sbr.rel (%p402) target = $region48
      $region47: #{tpu_custom_call.1} parent=5 // pred_region
        %s406 = ssub.s32 %s30, 1
        // Predicated region
        $region49: #{tpu_custom_call.1} parent=47 // pred_check
          %p407 = pneg %p63
        $region50: #{tpu_custom_call.1} parent=47 // pred_check_branch
          %409 = sbr.rel (%p407) target = $region52
        $region51: #{tpu_custom_call.1} parent=47 // pred_region
          %410 = dma.done [#allocation5], 16
        $region52: #{tpu_custom_call.1} parent=47 // pred_fallthru
          _
        %s411 = sand.u32 %s78, 1
        %s412 = scalar_lea.sflag [#allocation3], %s411
        %s413 = sand.u32 %s78, 1
        %s414 = smul.addr %s413, 64
        %s415 = scalar_lea.vmem [#allocation6], %s414
        // Predicated region
        $region53: #{tpu_custom_call.1} parent=47 // pred_check
          %p416 = pneg %p91
        $region54: #{tpu_custom_call.1} parent=47 // pred_check_branch
          %418 = sbr.rel (%p416) target = $region56
        $region55: #{tpu_custom_call.1} parent=47 // pred_region
          %419 = dma.done %s412, 1024
        $region56: #{tpu_custom_call.1} parent=47 // pred_fallthru
          _
        %s420 = sand.u32 %s35, 1
        %s421 = scalar_lea.sflag [#allocation8], %s420
        %s422 = sand.u32 %s106, 1
        %s423 = smul.addr %s422, 64
        %s424 = scalar_lea.vmem [#allocation7], %s423
        // Predicated region
        $region57: #{tpu_custom_call.1} parent=47 // pred_check
          %p425 = pneg %p119
        $region58: #{tpu_custom_call.1} parent=47 // pred_check_branch
          %427 = sbr.rel (%p425) target = $region60
        $region59: #{tpu_custom_call.1} parent=47 // pred_region
          %428 = dma.done %s421, 1024
        $region60: #{tpu_custom_call.1} parent=47 // pred_fallthru
          _
        %s429 = sand.u32 %s35, 1
        %s430 = scalar_lea.sflag [#allocation8], %s429
        %s431 = sand.u32 %s134, 1
        %s432 = smul.addr %s431, 64
        %s433 = scalar_lea.vmem [#allocation9], %s432
        // Predicated region
        $region61: #{tpu_custom_call.1} parent=47 // pred_check
          %p434 = pneg %p147
        $region62: #{tpu_custom_call.1} parent=47 // pred_check_branch
          %436 = sbr.rel (%p434) target = $region64
        $region63: #{tpu_custom_call.1} parent=47 // pred_region
          %437 = dma.done %s430, 1024
        $region64: #{tpu_custom_call.1} parent=47 // pred_fallthru
          _
        // Predicated region
        $region65: #{tpu_custom_call.1} parent=47 // pred_check
          %p438 = pneg %p168
        $region66: #{tpu_custom_call.1} parent=47 // pred_check_branch
          %440 = sbr.rel (%p438) target = $region68
        $region67: #{tpu_custom_call.1} parent=47 // pred_region
          %441 = dma.done [#allocation11], 256
        $region68: #{tpu_custom_call.1} parent=47 // pred_fallthru
          _
        // Predicated region
        $region69: #{tpu_custom_call.1} parent=47 // pred_check
          %p442 = pneg %p189
        $region70: #{tpu_custom_call.1} parent=47 // pred_check_branch
          %444 = sbr.rel (%p442) target = $region72
        $region71: #{tpu_custom_call.1} parent=47 // pred_region
          %445 = dma.done [#allocation11], 16
        $region72: #{tpu_custom_call.1} parent=47 // pred_fallthru
          _
        // Predicated region
        $region73: #{tpu_custom_call.1} parent=47 // pred_check
          %p446 = pneg %p210
        $region74: #{tpu_custom_call.1} parent=47 // pred_check_branch
          %448 = sbr.rel (%p446) target = $region76
        $region75: #{tpu_custom_call.1} parent=47 // pred_region
          %449 = dma.done [#allocation14], 256
        $region76: #{tpu_custom_call.1} parent=47 // pred_fallthru
          _
        %450 = sfence
        %p451 = pneg %p63
        %p452 = pneg %p60
        %s453 = sand.u32 %s78, 1
        %s454 = scalar_lea.sflag [#allocation3], %s453
        %s455 = sand.u32 %s78, 1
        %s456 = smul.addr %s455, 64
        %s457 = scalar_lea.vmem [#allocation6], %s456
        %p458 = pneg %p91
        %p459 = pneg %p88
        %s460 = sand.u32 %s35, 1
        %s461 = scalar_lea.sflag [#allocation8], %s460
        %s462 = sand.u32 %s106, 1
        %s463 = smul.addr %s462, 64
        %s464 = scalar_lea.vmem [#allocation7], %s463
        %p465 = pneg %p119
        %p466 = pneg %p116
        %s467 = sand.u32 %s35, 1
        %s468 = scalar_lea.sflag [#allocation8], %s467
        %s469 = sand.u32 %s134, 1
        %s470 = smul.addr %s469, 64
        %s471 = scalar_lea.vmem [#allocation9], %s470
        %p472 = pneg %p147
        %p473 = pneg %p144
        %p474 = pneg %p168
        %p475 = pneg %p165
        %p476 = pneg %p189
        %p477 = pneg %p186
        %p478 = pneg %p210
        %p479 = pneg %p207
        %p480 = pneg %p238
        %p481 = pneg %p235
        %s482 = sand.u32 %s225, 1
        %s483 = scalar_lea.sflag [#allocation4], %s482
        %s484 = sand.u32 %s225, 1
        %s485 = smul.addr %s484, 64
        %s486 = scalar_lea.vmem [#allocation15], %s485
        %p487 = pneg %p266
        %p488 = pneg %p263
        %s489 = sand.u32 %s253, 1
        %s490 = scalar_lea.sflag [#allocation17], %s489
        %s491 = sand.u32 %s253, 1
        %s492 = smul.addr %s491, 64
        %s493 = scalar_lea.vmem [#allocation16], %s492
        %s494 = smul.u32 16, %s40
        %s495 = smul.u32 16, %s40
        %s496 = smul.u32 16, %s40
        %s497 = smul.u32 16, %s40
        %s498 = smul.u32 16, %s40
        %v500 = vld [vmem:[%s415] sm:$0xf]
        %v501 = vld [vmem:[%s415 + $0x4] sm:$0xf]
        %v502 = vld [vmem:[%s415 + $0x8] sm:$0xf]
        %v503 = vld [vmem:[%s415 + $0xc] sm:$0xf]
        %v504 = vld [vmem:[%s415 + $0x10] sm:$0xf]
        %v505 = vld [vmem:[%s415 + $0x14] sm:$0xf]
        %v506 = vld [vmem:[%s415 + $0x18] sm:$0xf]
        %v507 = vld [vmem:[%s415 + $0x1c] sm:$0xf]
        %v508 = vld [vmem:[%s415 + $0x20] sm:$0xf]
        %v509 = vld [vmem:[%s415 + $0x24] sm:$0xf]
        %v510 = vld [vmem:[%s415 + $0x28] sm:$0xf]
        %v511 = vld [vmem:[%s415 + $0x2c] sm:$0xf]
        %v512 = vld [vmem:[%s415 + $0x30] sm:$0xf]
        %v513 = vld [vmem:[%s415 + $0x34] sm:$0xf]
        %v514 = vld [vmem:[%s415 + $0x38] sm:$0xf]
        %v515 = vld [vmem:[%s415 + $0x3c] sm:$0xf]
        %v516 = vunpack.c.l.bf16 %v500
        %v517 = vunpack.c.l.bf16 %v501
        %v518 = vunpack.c.l.bf16 %v502
        %v519 = vunpack.c.l.bf16 %v503
        %v520 = vunpack.c.l.bf16 %v504
        %v521 = vunpack.c.l.bf16 %v505
        %v522 = vunpack.c.l.bf16 %v506
        %v523 = vunpack.c.l.bf16 %v507
        %v524 = vunpack.c.l.bf16 %v508
        %v525 = vunpack.c.l.bf16 %v509
        %v526 = vunpack.c.l.bf16 %v510
        %v527 = vunpack.c.l.bf16 %v511
        %v528 = vunpack.c.l.bf16 %v512
        %v529 = vunpack.c.l.bf16 %v513
        %v530 = vunpack.c.l.bf16 %v514
        %v531 = vunpack.c.l.bf16 %v515
        %s532 = sld [smem:[#allocation2]]
        %v533 = vstv %s532
        %v534 = vmul.f32 %v516, %v533
        %v535 = vmul.f32 %v517, %v533
        %v536 = vmul.f32 %v518, %v533
        %v537 = vmul.f32 %v519, %v533
        %v538 = vmul.f32 %v520, %v533
        %v539 = vmul.f32 %v521, %v533
        %v540 = vmul.f32 %v522, %v533
        %v541 = vmul.f32 %v523, %v533
        %v542 = vmul.f32 %v524, %v533
        %v543 = vmul.f32 %v525, %v533
        %v544 = vmul.f32 %v526, %v533
        %v545 = vmul.f32 %v527, %v533
        %v546 = vmul.f32 %v528, %v533
        %v547 = vmul.f32 %v529, %v533
        %v548 = vmul.f32 %v530, %v533
        %v549 = vmul.f32 %v531, %v533
        %v550 = vld [vmem:[%s424] sm:$0xf]
        %v551 = vld [vmem:[%s424 + $0x4] sm:$0xf]
        %v552 = vld [vmem:[%s424 + $0x8] sm:$0xf]
        %v553 = vld [vmem:[%s424 + $0xc] sm:$0xf]
        %v554 = vld [vmem:[%s424 + $0x10] sm:$0xf]
        %v555 = vld [vmem:[%s424 + $0x14] sm:$0xf]
        %v556 = vld [vmem:[%s424 + $0x18] sm:$0xf]
        %v557 = vld [vmem:[%s424 + $0x1c] sm:$0xf]
        %v558 = vld [vmem:[%s424 + $0x20] sm:$0xf]
        %v559 = vld [vmem:[%s424 + $0x24] sm:$0xf]
        %v560 = vld [vmem:[%s424 + $0x28] sm:$0xf]
        %v561 = vld [vmem:[%s424 + $0x2c] sm:$0xf]
        %v562 = vld [vmem:[%s424 + $0x30] sm:$0xf]
        %v563 = vld [vmem:[%s424 + $0x34] sm:$0xf]
        %v564 = vld [vmem:[%s424 + $0x38] sm:$0xf]
        %v565 = vld [vmem:[%s424 + $0x3c] sm:$0xf]
        %v566 = vunpack.c.l.bf16 %v550
        %v567 = vunpack.c.l.bf16 %v551
        %v568 = vunpack.c.l.bf16 %v552
        %v569 = vunpack.c.l.bf16 %v553
        %v570 = vunpack.c.l.bf16 %v554
        %v571 = vunpack.c.l.bf16 %v555
        %v572 = vunpack.c.l.bf16 %v556
        %v573 = vunpack.c.l.bf16 %v557
        %v574 = vunpack.c.l.bf16 %v558
        %v575 = vunpack.c.l.bf16 %v559
        %v576 = vunpack.c.l.bf16 %v560
        %v577 = vunpack.c.l.bf16 %v561
        %v578 = vunpack.c.l.bf16 %v562
        %v579 = vunpack.c.l.bf16 %v563
        %v580 = vunpack.c.l.bf16 %v564
        %v581 = vunpack.c.l.bf16 %v565
        %s582 = sld [smem:[#allocation2 + $0x1]]
        %v583 = vstv %s582
        %v584 = vmul.f32 %v566, %v583
        %v585 = vmul.f32 %v567, %v583
        %v586 = vmul.f32 %v568, %v583
        %v587 = vmul.f32 %v569, %v583
        %v588 = vmul.f32 %v570, %v583
        %v589 = vmul.f32 %v571, %v583
        %v590 = vmul.f32 %v572, %v583
        %v591 = vmul.f32 %v573, %v583
        %v592 = vmul.f32 %v574, %v583
        %v593 = vmul.f32 %v575, %v583
        %v594 = vmul.f32 %v576, %v583
        %v595 = vmul.f32 %v577, %v583
        %v596 = vmul.f32 %v578, %v583
        %v597 = vmul.f32 %v579, %v583
        %v598 = vmul.f32 %v580, %v583
        %v599 = vmul.f32 %v581, %v583
        %v600 = vadd.f32 %v534, %v584
        %v601 = vadd.f32 %v535, %v585
        %v602 = vadd.f32 %v536, %v586
        %v603 = vadd.f32 %v537, %v587
        %v604 = vadd.f32 %v538, %v588
        %v605 = vadd.f32 %v539, %v589
        %v606 = vadd.f32 %v540, %v590
        %v607 = vadd.f32 %v541, %v591
        %v608 = vadd.f32 %v542, %v592
        %v609 = vadd.f32 %v543, %v593
        %v610 = vadd.f32 %v544, %v594
        %v611 = vadd.f32 %v545, %v595
        %v612 = vadd.f32 %v546, %v596
        %v613 = vadd.f32 %v547, %v597
        %v614 = vadd.f32 %v548, %v598
        %v615 = vadd.f32 %v549, %v599
        %v616 = vld [vmem:[%s433] sm:$0xf]
        %v617 = vld [vmem:[%s433 + $0x4] sm:$0xf]
        %v618 = vld [vmem:[%s433 + $0x8] sm:$0xf]
        %v619 = vld [vmem:[%s433 + $0xc] sm:$0xf]
        %v620 = vld [vmem:[%s433 + $0x10] sm:$0xf]
        %v621 = vld [vmem:[%s433 + $0x14] sm:$0xf]
        %v622 = vld [vmem:[%s433 + $0x18] sm:$0xf]
        %v623 = vld [vmem:[%s433 + $0x1c] sm:$0xf]
        %v624 = vld [vmem:[%s433 + $0x20] sm:$0xf]
        %v625 = vld [vmem:[%s433 + $0x24] sm:$0xf]
        %v626 = vld [vmem:[%s433 + $0x28] sm:$0xf]
        %v627 = vld [vmem:[%s433 + $0x2c] sm:$0xf]
        %v628 = vld [vmem:[%s433 + $0x30] sm:$0xf]
        %v629 = vld [vmem:[%s433 + $0x34] sm:$0xf]
        %v630 = vld [vmem:[%s433 + $0x38] sm:$0xf]
        %v631 = vld [vmem:[%s433 + $0x3c] sm:$0xf]
        %v632 = vunpack.c.l.bf16 %v616
        %v633 = vunpack.c.l.bf16 %v617
        %v634 = vunpack.c.l.bf16 %v618
        %v635 = vunpack.c.l.bf16 %v619
        %v636 = vunpack.c.l.bf16 %v620
        %v637 = vunpack.c.l.bf16 %v621
        %v638 = vunpack.c.l.bf16 %v622
        %v639 = vunpack.c.l.bf16 %v623
        %v640 = vunpack.c.l.bf16 %v624
        %v641 = vunpack.c.l.bf16 %v625
        %v642 = vunpack.c.l.bf16 %v626
        %v643 = vunpack.c.l.bf16 %v627
        %v644 = vunpack.c.l.bf16 %v628
        %v645 = vunpack.c.l.bf16 %v629
        %v646 = vunpack.c.l.bf16 %v630
        %v647 = vunpack.c.l.bf16 %v631
        %s648 = sld [smem:[#allocation2 + $0x2]]
        %v649 = vstv %s648
        %v650 = vmul.f32 %v632, %v649
        %v651 = vmul.f32 %v633, %v649
        %v652 = vmul.f32 %v634, %v649
        %v653 = vmul.f32 %v635, %v649
        %v654 = vmul.f32 %v636, %v649
        %v655 = vmul.f32 %v637, %v649
        %v656 = vmul.f32 %v638, %v649
        %v657 = vmul.f32 %v639, %v649
        %v658 = vmul.f32 %v640, %v649
        %v659 = vmul.f32 %v641, %v649
        %v660 = vmul.f32 %v642, %v649
        %v661 = vmul.f32 %v643, %v649
        %v662 = vmul.f32 %v644, %v649
        %v663 = vmul.f32 %v645, %v649
        %v664 = vmul.f32 %v646, %v649
        %v665 = vmul.f32 %v647, %v649
        %v666 = vadd.f32 %v600, %v650
        %v667 = vadd.f32 %v601, %v651
        %v668 = vadd.f32 %v602, %v652
        %v669 = vadd.f32 %v603, %v653
        %v670 = vadd.f32 %v604, %v654
        %v671 = vadd.f32 %v605, %v655
        %v672 = vadd.f32 %v606, %v656
        %v673 = vadd.f32 %v607, %v657
        %v674 = vadd.f32 %v608, %v658
        %v675 = vadd.f32 %v609, %v659
        %v676 = vadd.f32 %v610, %v660
        %v677 = vadd.f32 %v611, %v661
        %v678 = vadd.f32 %v612, %v662
        %v679 = vadd.f32 %v613, %v663
        %v680 = vadd.f32 %v614, %v664
        %v681 = vadd.f32 %v615, %v665
        %v682 = vpack.c.bf16 %v667, %v666
        %v683 = vpack.c.bf16 %v669, %v668
        %v684 = vpack.c.bf16 %v671, %v670
        %v685 = vpack.c.bf16 %v673, %v672
        %v686 = vpack.c.bf16 %v675, %v674
        %v687 = vpack.c.bf16 %v677, %v676
        %v688 = vpack.c.bf16 %v679, %v678
        %v689 = vpack.c.bf16 %v681, %v680
        %v690 = vld [vmem:[#allocation10] sm:$0xf]
        %v691 = vld [vmem:[#allocation10 + $0x4] sm:$0xf]
        %v692 = vld [vmem:[#allocation10 + $0x8] sm:$0xf]
        %v693 = vld [vmem:[#allocation10 + $0xc] sm:$0xf]
        %v694 = vld [vmem:[#allocation12] sm:$0x1]
        %v696 = vlaneseq
        %v697 = vshrl.u32 %v696, 7
        %v698 = vsub.s32 0, %v697
        %v699 = vrot.slane %v694, %v698
        %v705 = vunpack.c.l.b16 %v690
        %v706 = vunpack.c.l.b16 %v691
        %v707 = vunpack.c.l.b16 %v692
        %v708 = vunpack.c.l.b16 %v693
        %v709 = vpack.c.b16 %v706, %v705
        %v710 = vpack.c.b16 %v708, %v707
        %vm713 = vcmask 261120
        %v715 = vsel %vm713, %v682, 0
        %v718 = vsel %vm713, %v683, 0
        %v721 = vsel %vm713, %v684, 0
        %v724 = vsel %vm713, %v685, 0
        %v727 = vsel %vm713, %v686, 0
        %v730 = vsel %vm713, %v687, 0
        %v733 = vsel %vm713, %v688, 0
        %v736 = vsel %vm713, %v689, 0
        %738 = vmatprep.subr.bf16.mxu0 0
        %739 = vmatpush1.bf16.msra.mxu0 %v709
        %740 = vmatprep.subr.bf16.mxu0 0
        %741 = vmatpush1.bf16.msra.mxu0 %v710
        %742 = vmatprep.subr.bf16.mxu0 0
        %743 = vmatpush1.bf16.msra.mxu0 0
        %744 = vmatprep.subr.bf16.mxu0 0
        %745 = vmatpush1.bf16.msra.mxu0 0
        %746 = vmatprep.subr.bf16.mxu0 0
        %747 = vmatpush1.bf16.msra.mxu0 0
        %748 = vmatprep.subr.bf16.mxu0 0
        %749 = vmatpush1.bf16.msra.mxu0 0
        %750 = vmatprep.subr.bf16.mxu0 0
        %751 = vmatpush1.bf16.msra.mxu0 0
        %752 = vmatprep.subr.bf16.mxu0 0
        %753 = vmatpush1.bf16.msra.mxu0 0
        %754 = vmatprep.subr.bf16.mxu0 0
        %755 = vmatpush1.bf16.msra.mxu0 0
        %756 = vmatprep.subr.bf16.mxu0 0
        %757 = vmatpush1.bf16.msra.mxu0 0
        %758 = vmatprep.subr.bf16.mxu0 0
        %759 = vmatpush1.bf16.msra.mxu0 0
        %760 = vmatprep.subr.bf16.mxu0 0
        %761 = vmatpush1.bf16.msra.mxu0 0
        %762 = vmatprep.subr.bf16.mxu0 0
        %763 = vmatpush1.bf16.msra.mxu0 0
        %764 = vmatprep.subr.bf16.mxu0 0
        %765 = vmatpush1.bf16.msra.mxu0 0
        %766 = vmatprep.subr.bf16.mxu0 0
        %767 = vmatpush1.bf16.msra.mxu0 0
        %768 = vmatprep.subr.bf16.mxu0 0
        %769 = vmatpush1.bf16.msra.mxu0 0
        %770 = vmatprep.mubr.bf16.mxu0 0
        %771 = vmatmul.mubr.bf16.gmra.mrb[0].mxu0 %v715
        %v772 = vpop.f32.mrb[0].mxu0
        %v773 = vadd.f32 %v699, %v772
        %v774 = vpop.f32.mrb[0].mxu0
        %v775 = vpop.f32.mrb[0].mxu0
        %v776 = vadd.f32 %v699, %v775
        %v777 = vpop.f32.mrb[0].mxu0
        %778 = vmatprep.mubr.bf16.mxu0 0
        %779 = vmatmul.mubr.bf16.gmra.mrb[0].mxu0 %v718
        %v780 = vpop.f32.mrb[0].mxu0
        %v781 = vadd.f32 %v699, %v780
        %v782 = vpop.f32.mrb[0].mxu0
        %v783 = vpop.f32.mrb[0].mxu0
        %v784 = vadd.f32 %v699, %v783
        %v785 = vpop.f32.mrb[0].mxu0
        %786 = vmatprep.mubr.bf16.mxu0 0
        %787 = vmatmul.mubr.bf16.gmra.mrb[0].mxu0 %v721
        %v788 = vpop.f32.mrb[0].mxu0
        %v789 = vadd.f32 %v699, %v788
        %v790 = vpop.f32.mrb[0].mxu0
        %v791 = vpop.f32.mrb[0].mxu0
        %v792 = vadd.f32 %v699, %v791
        %v793 = vpop.f32.mrb[0].mxu0
        %794 = vmatprep.mubr.bf16.mxu0 0
        %795 = vmatmul.mubr.bf16.gmra.mrb[0].mxu0 %v724
        %v796 = vpop.f32.mrb[0].mxu0
        %v797 = vadd.f32 %v699, %v796
        %v798 = vpop.f32.mrb[0].mxu0
        %v799 = vpop.f32.mrb[0].mxu0
        %v800 = vadd.f32 %v699, %v799
        %v801 = vpop.f32.mrb[0].mxu0
        %802 = vmatprep.mubr.bf16.mxu0 0
        %803 = vmatmul.mubr.bf16.gmra.mrb[0].mxu0 %v727
        %v804 = vpop.f32.mrb[0].mxu0
        %v805 = vadd.f32 %v699, %v804
        %v806 = vpop.f32.mrb[0].mxu0
        %v807 = vpop.f32.mrb[0].mxu0
        %v808 = vadd.f32 %v699, %v807
        %v809 = vpop.f32.mrb[0].mxu0
        %810 = vmatprep.mubr.bf16.mxu0 0
        %811 = vmatmul.mubr.bf16.gmra.mrb[0].mxu0 %v730
        %v812 = vpop.f32.mrb[0].mxu0
        %v813 = vadd.f32 %v699, %v812
        %v814 = vpop.f32.mrb[0].mxu0
        %v815 = vpop.f32.mrb[0].mxu0
        %v816 = vadd.f32 %v699, %v815
        %v817 = vpop.f32.mrb[0].mxu0
        %818 = vmatprep.mubr.bf16.mxu0 0
        %819 = vmatmul.mubr.bf16.gmra.mrb[0].mxu0 %v733
        %v820 = vpop.f32.mrb[0].mxu0
        %v821 = vadd.f32 %v699, %v820
        %v822 = vpop.f32.mrb[0].mxu0
        %v823 = vpop.f32.mrb[0].mxu0
        %v824 = vadd.f32 %v699, %v823
        %v825 = vpop.f32.mrb[0].mxu0
        %826 = vmatprep.mubr.bf16.mxu0 0
        %827 = vmatmul.mubr.bf16.gmra.mrb[0].mxu0 %v736
        %v828 = vpop.f32.mrb[0].mxu0
        %v829 = vadd.f32 %v699, %v828
        %v830 = vpop.f32.mrb[0].mxu0
        %v831 = vpop.f32.mrb[0].mxu0
        %v832 = vadd.f32 %v699, %v831
        %v833 = vpop.f32.mrb[0].mxu0
        %834 = vdwg.mxu0
        %vm835 = vcmp.ge.f32.partialorder %v773, 0.0
        %vm836 = vcmp.ge.f32.partialorder %v776, 0.0
        %vm837 = vcmp.ge.f32.partialorder %v781, 0.0
        %vm838 = vcmp.ge.f32.partialorder %v784, 0.0
        %vm839 = vcmp.ge.f32.partialorder %v789, 0.0
        %vm840 = vcmp.ge.f32.partialorder %v792, 0.0
        %vm841 = vcmp.ge.f32.partialorder %v797, 0.0
        %vm842 = vcmp.ge.f32.partialorder %v800, 0.0
        %vm843 = vcmp.ge.f32.partialorder %v805, 0.0
        %vm844 = vcmp.ge.f32.partialorder %v808, 0.0
        %vm845 = vcmp.ge.f32.partialorder %v813, 0.0
        %vm846 = vcmp.ge.f32.partialorder %v816, 0.0
        %vm847 = vcmp.ge.f32.partialorder %v821, 0.0
        %vm848 = vcmp.ge.f32.partialorder %v824, 0.0
        %vm849 = vcmp.ge.f32.partialorder %v829, 0.0
        %vm850 = vcmp.ge.f32.partialorder %v832, 0.0
        %v851 = vmul.f32 %v773, 0.01
        %v852 = vmul.f32 %v776, 0.01
        %v853 = vmul.f32 %v781, 0.01
        %v854 = vmul.f32 %v784, 0.01
        %v855 = vmul.f32 %v789, 0.01
        %v856 = vmul.f32 %v792, 0.01
        %v857 = vmul.f32 %v797, 0.01
        %v858 = vmul.f32 %v800, 0.01
        %v859 = vmul.f32 %v805, 0.01
        %v860 = vmul.f32 %v808, 0.01
        %v861 = vmul.f32 %v813, 0.01
        %v862 = vmul.f32 %v816, 0.01
        %v863 = vmul.f32 %v821, 0.01
        %v864 = vmul.f32 %v824, 0.01
        %v865 = vmul.f32 %v829, 0.01
        %v866 = vmul.f32 %v832, 0.01
        %v867 = vsel %vm835, %v773, %v851
        %v868 = vsel %vm836, %v776, %v852
        %v869 = vsel %vm837, %v781, %v853
        %v870 = vsel %vm838, %v784, %v854
        %v871 = vsel %vm839, %v789, %v855
        %v872 = vsel %vm840, %v792, %v856
        %v873 = vsel %vm841, %v797, %v857
        %v874 = vsel %vm842, %v800, %v858
        %v875 = vsel %vm843, %v805, %v859
        %v876 = vsel %vm844, %v808, %v860
        %v877 = vsel %vm845, %v813, %v861
        %v878 = vsel %vm846, %v816, %v862
        %v879 = vsel %vm847, %v821, %v863
        %v880 = vsel %vm848, %v824, %v864
        %v881 = vsel %vm849, %v829, %v865
        %v882 = vsel %vm850, %v832, %v866
        %v883 = vpack.c.bf16 %v868, %v867
        %v884 = vpack.c.bf16 %v870, %v869
        %v885 = vpack.c.bf16 %v872, %v871
        %v886 = vpack.c.bf16 %v874, %v873
        %v887 = vpack.c.bf16 %v876, %v875
        %v888 = vpack.c.bf16 %v878, %v877
        %v889 = vpack.c.bf16 %v880, %v879
        %v890 = vpack.c.bf16 %v882, %v881
        %v891 = vld [vmem:[#allocation13] sm:$0xf]
        %v892 = vld [vmem:[#allocation13 + $0x4] sm:$0xf]
        %v893 = vld [vmem:[#allocation13 + $0x8] sm:$0xf]
        %v894 = vld [vmem:[#allocation13 + $0xc] sm:$0xf]
        %v899 = vunpack.c.l.b16 %v891
        %v900 = vunpack.c.l.b16 %v892
        %v901 = vunpack.c.l.b16 %v893
        %v902 = vunpack.c.l.b16 %v894
        %v903 = vpack.c.b16 %v900, %v899
        %v904 = vpack.c.b16 %v902, %v901
        %v908 = vsel %vm713, %v883, 0
        %v911 = vsel %vm713, %v884, 0
        %v914 = vsel %vm713, %v885, 0
        %v917 = vsel %vm713, %v886, 0
        %v920 = vsel %vm713, %v887, 0
        %v923 = vsel %vm713, %v888, 0
        %v926 = vsel %vm713, %v889, 0
        %v929 = vsel %vm713, %v890, 0
        %931 = vmatprep.subr.bf16.mxu0 0
        %932 = vmatpush1.bf16.msra.mxu0 %v903
        %933 = vmatprep.subr.bf16.mxu0 0
        %934 = vmatpush1.bf16.msra.mxu0 %v904
        %935 = vmatprep.subr.bf16.mxu0 0
        %936 = vmatpush1.bf16.msra.mxu0 0
        %937 = vmatprep.subr.bf16.mxu0 0
        %938 = vmatpush1.bf16.msra.mxu0 0
        %939 = vmatprep.subr.bf16.mxu0 0
        %940 = vmatpush1.bf16.msra.mxu0 0
        %941 = vmatprep.subr.bf16.mxu0 0
        %942 = vmatpush1.bf16.msra.mxu0 0
        %943 = vmatprep.subr.bf16.mxu0 0
        %944 = vmatpush1.bf16.msra.mxu0 0
        %945 = vmatprep.subr.bf16.mxu0 0
        %946 = vmatpush1.bf16.msra.mxu0 0
        %947 = vmatprep.subr.bf16.mxu0 0
        %948 = vmatpush1.bf16.msra.mxu0 0
        %949 = vmatprep.subr.bf16.mxu0 0
        %950 = vmatpush1.bf16.msra.mxu0 0
        %951 = vmatprep.subr.bf16.mxu0 0
        %952 = vmatpush1.bf16.msra.mxu0 0
        %953 = vmatprep.subr.bf16.mxu0 0
        %954 = vmatpush1.bf16.msra.mxu0 0
        %955 = vmatprep.subr.bf16.mxu0 0
        %956 = vmatpush1.bf16.msra.mxu0 0
        %957 = vmatprep.subr.bf16.mxu0 0
        %958 = vmatpush1.bf16.msra.mxu0 0
        %959 = vmatprep.subr.bf16.mxu0 0
        %960 = vmatpush1.bf16.msra.mxu0 0
        %961 = vmatprep.subr.bf16.mxu0 0
        %962 = vmatpush1.bf16.msra.mxu0 0
        %963 = vmatprep.mubr.bf16.mxu0 0
        %964 = vmatmul.mubr.bf16.gmra.mrb[0].mxu0 %v908
        %v965 = vpop.f32.mrb[0].mxu0
        %v966 = vadd.f32 0.0, %v965
        %v967 = vpop.f32.mrb[0].mxu0
        %v968 = vpop.f32.mrb[0].mxu0
        %v969 = vadd.f32 0.0, %v968
        %v970 = vpop.f32.mrb[0].mxu0
        %971 = vmatprep.mubr.bf16.mxu0 0
        %972 = vmatmul.mubr.bf16.gmra.mrb[0].mxu0 %v911
        %v973 = vpop.f32.mrb[0].mxu0
        %v974 = vadd.f32 0.0, %v973
        %v975 = vpop.f32.mrb[0].mxu0
        %v976 = vpop.f32.mrb[0].mxu0
        %v977 = vadd.f32 0.0, %v976
        %v978 = vpop.f32.mrb[0].mxu0
        %979 = vmatprep.mubr.bf16.mxu0 0
        %980 = vmatmul.mubr.bf16.gmra.mrb[0].mxu0 %v914
        %v981 = vpop.f32.mrb[0].mxu0
        %v982 = vadd.f32 0.0, %v981
        %v983 = vpop.f32.mrb[0].mxu0
        %v984 = vpop.f32.mrb[0].mxu0
        %v985 = vadd.f32 0.0, %v984
        %v986 = vpop.f32.mrb[0].mxu0
        %987 = vmatprep.mubr.bf16.mxu0 0
        %988 = vmatmul.mubr.bf16.gmra.mrb[0].mxu0 %v917
        %v989 = vpop.f32.mrb[0].mxu0
        %v990 = vadd.f32 0.0, %v989
        %v991 = vpop.f32.mrb[0].mxu0
        %v992 = vpop.f32.mrb[0].mxu0
        %v993 = vadd.f32 0.0, %v992
        %v994 = vpop.f32.mrb[0].mxu0
        %995 = vmatprep.mubr.bf16.mxu0 0
        %996 = vmatmul.mubr.bf16.gmra.mrb[0].mxu0 %v920
        %v997 = vpop.f32.mrb[0].mxu0
        %v998 = vadd.f32 0.0, %v997
        %v999 = vpop.f32.mrb[0].mxu0
        %v1000 = vpop.f32.mrb[0].mxu0
        %v1001 = vadd.f32 0.0, %v1000
        %v1002 = vpop.f32.mrb[0].mxu0
        %1003 = vmatprep.mubr.bf16.mxu0 0
        %1004 = vmatmul.mubr.bf16.gmra.mrb[0].mxu0 %v923
        %v1005 = vpop.f32.mrb[0].mxu0
        %v1006 = vadd.f32 0.0, %v1005
        %v1007 = vpop.f32.mrb[0].mxu0
        %v1008 = vpop.f32.mrb[0].mxu0
        %v1009 = vadd.f32 0.0, %v1008
        %v1010 = vpop.f32.mrb[0].mxu0
        %1011 = vmatprep.mubr.bf16.mxu0 0
        %1012 = vmatmul.mubr.bf16.gmra.mrb[0].mxu0 %v926
        %v1013 = vpop.f32.mrb[0].mxu0
        %v1014 = vadd.f32 0.0, %v1013
        %v1015 = vpop.f32.mrb[0].mxu0
        %v1016 = vpop.f32.mrb[0].mxu0
        %v1017 = vadd.f32 0.0, %v1016
        %v1018 = vpop.f32.mrb[0].mxu0
        %1019 = vmatprep.mubr.bf16.mxu0 0
        %1020 = vmatmul.mubr.bf16.gmra.mrb[0].mxu0 %v929
        %v1021 = vpop.f32.mrb[0].mxu0
        %v1022 = vadd.f32 0.0, %v1021
        %v1023 = vpop.f32.mrb[0].mxu0
        %v1024 = vpop.f32.mrb[0].mxu0
        %v1025 = vadd.f32 0.0, %v1024
        %v1026 = vpop.f32.mrb[0].mxu0
        %1027 = vdwg.mxu0
        %v1028 = vpack.c.bf16 %v969, %v966
        %v1029 = vpack.c.bf16 %v977, %v974
        %v1030 = vpack.c.bf16 %v985, %v982
        %v1031 = vpack.c.bf16 %v993, %v990
        %v1032 = vpack.c.bf16 %v1001, %v998
        %v1033 = vpack.c.bf16 %v1009, %v1006
        %v1034 = vpack.c.bf16 %v1017, %v1014
        %v1035 = vpack.c.bf16 %v1025, %v1022
        %v1044 = vunpack.c.l.b16 %v1028
        %v1045 = vunpack.c.h.b16 %v1028
        %v1046 = vunpack.c.l.b16 %v1029
        %v1047 = vunpack.c.h.b16 %v1029
        %v1048 = vunpack.c.l.b16 %v1030
        %v1049 = vunpack.c.h.b16 %v1030
        %v1050 = vunpack.c.l.b16 %v1031
        %v1051 = vunpack.c.h.b16 %v1031
        %v1052 = vunpack.c.l.b16 %v1032
        %v1053 = vunpack.c.h.b16 %v1032
        %v1054 = vunpack.c.l.b16 %v1033
        %v1055 = vunpack.c.h.b16 %v1033
        %v1056 = vunpack.c.l.b16 %v1034
        %v1057 = vunpack.c.h.b16 %v1034
        %v1058 = vunpack.c.l.b16 %v1035
        %v1059 = vunpack.c.h.b16 %v1035
        %v1060 = vpack.c.b16 %v1044, %v1044
        %v1061 = vpack.c.b16 %v1045, %v1045
        %v1062 = vpack.c.b16 %v1046, %v1046
        %v1063 = vpack.c.b16 %v1047, %v1047
        %v1064 = vpack.c.b16 %v1048, %v1048
        %v1065 = vpack.c.b16 %v1049, %v1049
        %v1066 = vpack.c.b16 %v1050, %v1050
        %v1067 = vpack.c.b16 %v1051, %v1051
        %v1068 = vpack.c.b16 %v1052, %v1052
        %v1069 = vpack.c.b16 %v1053, %v1053
        %v1070 = vpack.c.b16 %v1054, %v1054
        %v1071 = vpack.c.b16 %v1055, %v1055
        %v1072 = vpack.c.b16 %v1056, %v1056
        %v1073 = vpack.c.b16 %v1057, %v1057
        %v1074 = vpack.c.b16 %v1058, %v1058
        %v1075 = vpack.c.b16 %v1059, %v1059
        %vm1092 = vcmask 257024
        %1093 = vst.msk [vmem:[%s486] sm:$0xf] %vm1092, %v1060
        %1094 = vst.msk [vmem:[%s486 + $0x4] sm:$0xf] %vm1092, %v1061
        %1095 = vst.msk [vmem:[%s486 + $0x8] sm:$0xf] %vm1092, %v1062
        %1096 = vst.msk [vmem:[%s486 + $0xc] sm:$0xf] %vm1092, %v1063
        %1097 = vst.msk [vmem:[%s486 + $0x10] sm:$0xf] %vm1092, %v1064
        %1098 = vst.msk [vmem:[%s486 + $0x14] sm:$0xf] %vm1092, %v1065
        %1099 = vst.msk [vmem:[%s486 + $0x18] sm:$0xf] %vm1092, %v1066
        %1100 = vst.msk [vmem:[%s486 + $0x1c] sm:$0xf] %vm1092, %v1067
        %1101 = vst.msk [vmem:[%s486 + $0x20] sm:$0xf] %vm1092, %v1068
        %1102 = vst.msk [vmem:[%s486 + $0x24] sm:$0xf] %vm1092, %v1069
        %1103 = vst.msk [vmem:[%s486 + $0x28] sm:$0xf] %vm1092, %v1070
        %1104 = vst.msk [vmem:[%s486 + $0x2c] sm:$0xf] %vm1092, %v1071
        %1105 = vst.msk [vmem:[%s486 + $0x30] sm:$0xf] %vm1092, %v1072
        %1106 = vst.msk [vmem:[%s486 + $0x34] sm:$0xf] %vm1092, %v1073
        %1107 = vst.msk [vmem:[%s486 + $0x38] sm:$0xf] %vm1092, %v1074
        %1108 = vst.msk [vmem:[%s486 + $0x3c] sm:$0xf] %vm1092, %v1075
        %v1117 = vunpack.c.l.b16 %v883
        %v1118 = vunpack.c.h.b16 %v883
        %v1119 = vunpack.c.l.b16 %v884
        %v1120 = vunpack.c.h.b16 %v884
        %v1121 = vunpack.c.l.b16 %v885
        %v1122 = vunpack.c.h.b16 %v885
        %v1123 = vunpack.c.l.b16 %v886
        %v1124 = vunpack.c.h.b16 %v886
        %v1125 = vunpack.c.l.b16 %v887
        %v1126 = vunpack.c.h.b16 %v887
        %v1127 = vunpack.c.l.b16 %v888
        %v1128 = vunpack.c.h.b16 %v888
        %v1129 = vunpack.c.l.b16 %v889
        %v1130 = vunpack.c.h.b16 %v889
        %v1131 = vunpack.c.l.b16 %v890
        %v1132 = vunpack.c.h.b16 %v890
        %v1133 = vpack.c.b16 %v1117, %v1117
        %v1134 = vpack.c.b16 %v1118, %v1118
        %v1135 = vpack.c.b16 %v1119, %v1119
        %v1136 = vpack.c.b16 %v1120, %v1120
        %v1137 = vpack.c.b16 %v1121, %v1121
        %v1138 = vpack.c.b16 %v1122, %v1122
        %v1139 = vpack.c.b16 %v1123, %v1123
        %v1140 = vpack.c.b16 %v1124, %v1124
        %v1141 = vpack.c.b16 %v1125, %v1125
        %v1142 = vpack.c.b16 %v1126, %v1126
        %v1143 = vpack.c.b16 %v1127, %v1127
        %v1144 = vpack.c.b16 %v1128, %v1128
        %v1145 = vpack.c.b16 %v1129, %v1129
        %v1146 = vpack.c.b16 %v1130, %v1130
        %v1147 = vpack.c.b16 %v1131, %v1131
        %v1148 = vpack.c.b16 %v1132, %v1132
        %1149 = vrot.lane.b32.xlu0 %v1133, 96
        %v1150 = vpop.permute.xlu0 %1149
        %1151 = vrot.lane.b32.xlu0 %v1134, 96
        %v1152 = vpop.permute.xlu0 %1151
        %1153 = vrot.lane.b32.xlu0 %v1135, 96
        %v1154 = vpop.permute.xlu0 %1153
        %1155 = vrot.lane.b32.xlu0 %v1136, 96
        %v1156 = vpop.permute.xlu0 %1155
        %1157 = vrot.lane.b32.xlu0 %v1137, 96
        %v1158 = vpop.permute.xlu0 %1157
        %1159 = vrot.lane.b32.xlu0 %v1138, 96
        %v1160 = vpop.permute.xlu0 %1159
        %1161 = vrot.lane.b32.xlu0 %v1139, 96
        %v1162 = vpop.permute.xlu0 %1161
        %1163 = vrot.lane.b32.xlu0 %v1140, 96
        %v1164 = vpop.permute.xlu0 %1163
        %1165 = vrot.lane.b32.xlu0 %v1141, 96
        %v1166 = vpop.permute.xlu0 %1165
        %1167 = vrot.lane.b32.xlu0 %v1142, 96
        %v1168 = vpop.permute.xlu0 %1167
        %1169 = vrot.lane.b32.xlu0 %v1143, 96
        %v1170 = vpop.permute.xlu0 %1169
        %1171 = vrot.lane.b32.xlu0 %v1144, 96
        %v1172 = vpop.permute.xlu0 %1171
        %1173 = vrot.lane.b32.xlu0 %v1145, 96
        %v1174 = vpop.permute.xlu0 %1173
        %1175 = vrot.lane.b32.xlu0 %v1146, 96
        %v1176 = vpop.permute.xlu0 %1175
        %1177 = vrot.lane.b32.xlu0 %v1147, 96
        %v1178 = vpop.permute.xlu0 %1177
        %1179 = vrot.lane.b32.xlu0 %v1148, 96
        %v1180 = vpop.permute.xlu0 %1179
        %1197 = vst.msk [vmem:[%s493] sm:$0xf] %vm1092, %v1150
        %1198 = vst.msk [vmem:[%s493 + $0x4] sm:$0xf] %vm1092, %v1152
        %1199 = vst.msk [vmem:[%s493 + $0x8] sm:$0xf] %vm1092, %v1154
        %1200 = vst.msk [vmem:[%s493 + $0xc] sm:$0xf] %vm1092, %v1156
        %1201 = vst.msk [vmem:[%s493 + $0x10] sm:$0xf] %vm1092, %v1158
        %1202 = vst.msk [vmem:[%s493 + $0x14] sm:$0xf] %vm1092, %v1160
        %1203 = vst.msk [vmem:[%s493 + $0x18] sm:$0xf] %vm1092, %v1162
        %1204 = vst.msk [vmem:[%s493 + $0x1c] sm:$0xf] %vm1092, %v1164
        %1205 = vst.msk [vmem:[%s493 + $0x20] sm:$0xf] %vm1092, %v1166
        %1206 = vst.msk [vmem:[%s493 + $0x24] sm:$0xf] %vm1092, %v1168
        %1207 = vst.msk [vmem:[%s493 + $0x28] sm:$0xf] %vm1092, %v1170
        %1208 = vst.msk [vmem:[%s493 + $0x2c] sm:$0xf] %vm1092, %v1172
        %1209 = vst.msk [vmem:[%s493 + $0x30] sm:$0xf] %vm1092, %v1174
        %1210 = vst.msk [vmem:[%s493 + $0x34] sm:$0xf] %vm1092, %v1176
        %1211 = vst.msk [vmem:[%s493 + $0x38] sm:$0xf] %vm1092, %v1178
        %1212 = vst.msk [vmem:[%s493 + $0x3c] sm:$0xf] %vm1092, %v1180
        %s1213 = sand.u32 %s225, 1
        %s1214 = scalar_lea.sflag [#allocation4], %s1213
        %s1215 = sand.u32 %s225, 1
        %s1216 = smul.addr %s1215, 64
        %s1217 = scalar_lea.vmem [#allocation15], %s1216
        %s1218 = sand.u32 %s253, 1
        %s1219 = scalar_lea.sflag [#allocation17], %s1218
        %s1220 = sand.u32 %s253, 1
        %s1221 = smul.addr %s1220, 64
        %s1222 = scalar_lea.vmem [#allocation16], %s1221
        // Predicated region
        $region77: #{tpu_custom_call.1} parent=47 // pred_check
          %p1223 = pneg %p235
        $region78: #{tpu_custom_call.1} parent=47 // pred_check_branch
          %1225 = sbr.rel (%p1223) target = $region80
        $region79: #{tpu_custom_call.1} parent=47 // pred_region
          %s1226 = smul.u32 16, %s40
          %s1228 = ssub.s32 1024, 1024
          %1229 = vsyncadd %s1214, %s1228
          %s1230 = smul.addr %s39, 48
          %s1231 = sadd.s32 %s1226, %s1230
          %s1232 = smul.addr %s1231, 64
          %s1233 = scalar_lea.hbm %s7, %s1232
          %s1234 = sshll.u32 %s1217, 4
          %s1235 = int_to_ptr.vmem [resolvable:$true] %s1234
          %1240 = dma.vmem_to_hbm [thread:$0]  %s1235, 1024, %s1233, %s1214, 64, 64, 4
        $region80: #{tpu_custom_call.1} parent=47 // pred_fallthru
          _
        // Predicated region
        $region81: #{tpu_custom_call.1} parent=47 // pred_check
          %p1241 = pneg %p263
        $region82: #{tpu_custom_call.1} parent=47 // pred_check_branch
          %1243 = sbr.rel (%p1241) target = $region84
        $region83: #{tpu_custom_call.1} parent=47 // pred_region
          %s1244 = smul.u32 16, %s40
          %s1246 = ssub.s32 1024, 1024
          %1247 = vsyncadd %s1219, %s1246
          %s1248 = smul.addr %s39, 48
          %s1249 = sadd.s32 %s1244, %s1248
          %s1250 = smul.addr %s1249, 64
          %s1251 = scalar_lea.hbm %s8, %s1250
          %s1252 = sshll.u32 %s1222, 4
          %s1253 = int_to_ptr.vmem [resolvable:$true] %s1252
          %1258 = dma.vmem_to_hbm [thread:$0]  %s1253, 1024, %s1251, %s1219, 64, 64, 4
        $region84: #{tpu_custom_call.1} parent=47 // pred_fallthru
          _
      $region48: #{tpu_custom_call.1} parent=5 // pred_fallthru
        _
      %p1259 = scmp.le.s32.totalorder 2, %s30
      // Predicated region
      $region85: #{tpu_custom_call.1} parent=5 // pred_check
        %p1260 = pneg %p1259
      $region86: #{tpu_custom_call.1} parent=5 // pred_check_branch
        %1262 = sbr.rel (%p1260) target = $region88
      $region87: #{tpu_custom_call.1} parent=5 // pred_region
        %s1263 = ssub.s32 %s30, 2
        // Predicated region
        $region89: #{tpu_custom_call.1} parent=87 // pred_check
          %p1264 = pneg %p241
        $region90: #{tpu_custom_call.1} parent=87 // pred_check_branch
          %1266 = sbr.rel (%p1264) target = $region92
        $region91: #{tpu_custom_call.1} parent=87 // pred_region
          %s1267 = sand.u32 %s226, 1
          %s1268 = scalar_lea.sflag [#allocation4], %s1267
          %s1269 = sand.u32 %s226, 1
          %s1270 = smul.addr %s1269, 64
          %s1271 = scalar_lea.vmem [#allocation15], %s1270
          %1272 = dma.done %s1268, 1024
        $region92: #{tpu_custom_call.1} parent=87 // pred_fallthru
          _
        // Predicated region
        $region93: #{tpu_custom_call.1} parent=87 // pred_check
          %p1273 = pneg %p269
        $region94: #{tpu_custom_call.1} parent=87 // pred_check_branch
          %1275 = sbr.rel (%p1273) target = $region96
        $region95: #{tpu_custom_call.1} parent=87 // pred_region
          %s1276 = sand.u32 %s254, 1
          %s1277 = scalar_lea.sflag [#allocation17], %s1276
          %s1278 = sand.u32 %s254, 1
          %s1279 = smul.addr %s1278, 64
          %s1280 = scalar_lea.vmem [#allocation16], %s1279
          %1281 = dma.done %s1277, 1024
        $region96: #{tpu_custom_call.1} parent=87 // pred_fallthru
          _
      $region88: #{tpu_custom_call.1} parent=5 // pred_fallthru
        _
    $region6: #{tpu_custom_call.1} parent=1 // loop_footer
      %s34 = sadd.s32 1, %s30
    $region7: #{tpu_custom_call.1} parent=1 // loop_footer_branch
      %29 = sbr.rel target = $region3
    $region8: #{tpu_custom_call.1} parent=1 // loop_exit
      _
    %1282 = vsyncpa [#allocation3], 1
    %s1283 = scalar_lea.sflag [#allocation3], 1
    %1284 = vsyncpa %s1283, 1
    %1285 = vsyncpa [#allocation8], 1
    %s1286 = scalar_lea.sflag [#allocation8], 1
    %1287 = vsyncpa %s1286, 1
    %1288 = vsyncpa [#allocation11], 1
    %1289 = vsyncpa [#allocation14], 1
    %1290 = vsyncpa [#allocation4], 1
    %s1291 = scalar_lea.sflag [#allocation4], 1
    %1292 = vsyncpa %s1291, 1
    %1293 = vsyncpa [#allocation17], 1
    %s1294 = scalar_lea.sflag [#allocation17], 1
    %1295 = vsyncpa %s1294, 1
    %1296 = vsyncpa [#allocation5], 1
    %s1297 = scalar_lea.sflag [#allocation5], 1
    %1298 = vsyncpa %s1297, 1

</llo_original>
